<compile_context>
chip_gen: v7x
topology: tpu7x:2x2x1
jax: 0.10.0
libtpu: 0.0.40
codegen_flags: <defaults>
</compile_context>

<pallas_src>
import functools

import jax
import jax.numpy as jnp
from jax.experimental import pallas as pl
from jax.experimental.pallas import tpu as pltpu


def _agcrn_cell_kernel(x_ref, state_ref, e_ref, s_ref,
                       wz_ref, wr_ref, wu_ref,
                       bz_ref, br_ref, bu_ref,
                       h_ref, *, cheb_k, hidden, dim_in, block_b):
    N, De = e_ref.shape
    H = hidden
    Di = dim_in
    C = Di + H
    K = cheb_k
    bt = block_b
    R = bt * N                                     # folded (batch, node) rows

    xb = x_ref[...].astype(jnp.float32)            # (bt, N, Di)
    sb = state_ref[...].astype(jnp.float32)        # (bt, N, H)
    E = e_ref[...].astype(jnp.float32)             # (N, De)
    S = s_ref[...].astype(jnp.float32)             # (K-1, N, N) precomputed supports

    # Row-major (b, n) views; per-node tensors tiled over the batch block once
    # (hoisted out of the projection calls -- broadcasts are not CSE'd).
    xb_rows = xb.reshape(R, Di)
    sb_rows = sb.reshape(R, H)
    e_rows = jnp.tile(E, (bt, 1))                  # (R, De)
    e_cols = [e_rows[:, d:d + 1] for d in range(De)]
    bz_rows = jnp.tile(bz_ref[...], (bt, 1))       # (R, H)
    br_rows = jnp.tile(br_ref[...], (bt, 1))
    bu_rows = jnp.tile(bu_ref[...], (bt, 1))

    def build_xe(xin):                 # xin: (bt, N, C) -> (R, De*K*C) bf16
        # Chebyshev graph conv.  Identity support == xin (no eye matmul); the
        # remaining batch-shared supports use small (N,N)x(N,C) matmuls whose
        # FLOPs are negligible vs. the fused projection below (kept f32).
        xg_b = []
        for b in range(bt):            # static: bt is a small batch block
            x2 = xin[b]                                           # (N, C)
            chunks = [x2]
            for k in range(K - 1):
                chunks.append(jnp.dot(S[k], x2,
                                      preferred_element_type=jnp.float32))
            xg_b.append(jnp.concatenate(chunks, axis=-1))         # (N, K*C)
        xg = jnp.stack(xg_b, axis=0).reshape(R, K * C)            # (R, K*C)
        # Node-adaptive expansion: a single big-contraction matmul replaces
        # the former De tiny matmuls + broadcast-accumulate chain.
        xe = jnp.concatenate([e_cols[d] * xg for d in range(De)], axis=-1)
        return xe.astype(jnp.bfloat16)                            # (R, De*K*C)

    # ---- gate: z, r (separate projections -> no lane-split of the result) ----
    xs = jnp.concatenate([xb, sb], axis=-1)                       # (bt, N, C)
    xe_g = build_xe(xs)
    z = jax.nn.sigmoid(jnp.dot(xe_g, wz_ref[...],
                               preferred_element_type=jnp.float32) + bz_rows)
    r = jax.nn.sigmoid(jnp.dot(xe_g, wr_ref[...],
                               preferred_element_type=jnp.float32) + br_rows)

    # ---- candidate ----
    cand = jnp.concatenate([xb_rows, z * sb_rows], axis=-1).reshape(bt, N, C)
    xe_u = build_xe(cand)
    hc = jnp.tanh(jnp.dot(xe_u, wu_ref[...],
                          preferred_element_type=jnp.float32) + bu_rows)

    # ---- new hidden state ----
    h = r * sb_rows + (1.0 - r) * hc                              # (R, H)

    # Lane-dense writeback: flatten (N, H) into one N*H lane axis (multiple of
    # 128 here) via lane-concat to avoid masked <128-lane partial stores.
    h3 = h.reshape(bt, N, H)
    h_flat = jnp.concatenate([h3[:, n, :] for n in range(N)], axis=-1)
    h_ref[...] = h_flat[:, None, :]                               # (bt, 1, N*H)


def _pick_block_b(batch, n_nodes, target_rows=256):
    """Batch block: fold ~target_rows rows per step, but keep >=2 grid blocks
    when batch >= 2 so both v7x TensorCores get work."""
    bt = max(1, min(batch, max(1, target_rows // max(n_nodes, 1))))
    if batch >= 2:
        bt = min(bt, max(1, batch // 2))
    while batch % bt:
        bt -= 1
    return bt


def agcrn_cell(x, state, node_embeddings, params, *, cheb_k, block_b=None):
    B, N, dim_in = x.shape
    hidden = state.shape[-1]
    embed_dim = node_embeddings.shape[-1]
    c_in = dim_in + hidden
    assert cheb_k >= 2
    f32 = jnp.float32

    E = node_embeddings.astype(f32)

    # ---- batch-invariant precompute, hoisted out of the per-batch grid ----
    A = jax.nn.softmax(jax.nn.relu(E @ E.T), axis=1)              # adaptive adjacency
    supports = [A]
    t_prev2, t_prev1 = jnp.eye(N, dtype=f32), A
    for _ in range(2, cheb_k):
        t = 2.0 * (A @ t_prev1) - t_prev2
        supports.append(t)
        t_prev2, t_prev1 = t_prev1, t
    S = jnp.stack(supports, axis=0)                               # (K-1, N, N)

    bias_g = E @ params["gate_b"].astype(f32)                     # (N, 2H)
    bz, br = bias_g[:, :hidden], bias_g[:, hidden:]
    bu = E @ params["update_b"].astype(f32)                       # (N, H)

    # Flatten weight pools to (embed_dim*cheb_k*c_in, out); split the gate pool
    # into z / r halves.  bf16 weights: higher MXU rate + half the DMA bytes.
    dkc = embed_dim * cheb_k * c_in
    gw = params["gate_w"].astype(f32)                             # (De, K, C, 2H)
    wz = gw[..., :hidden].reshape(dkc, hidden).astype(jnp.bfloat16)
    wr = gw[..., hidden:].reshape(dkc, hidden).astype(jnp.bfloat16)
    wu = params["update_w"].astype(f32).reshape(dkc, hidden).astype(jnp.bfloat16)

    bt = _pick_block_b(B, N) if block_b is None else block_b
    assert B % bt == 0

    kernel = functools.partial(_agcrn_cell_kernel, cheb_k=cheb_k, hidden=hidden,
                               dim_in=dim_in, block_b=bt)

    # Resident VMEM set (weights + supports + biases + blocks) is tiny at these
    # shapes (<1 MiB); 32 MiB scoped limit is safe on v5e/v6e/v7x alike.
    h_flat = pl.pallas_call(
        kernel,
        out_shape=jax.ShapeDtypeStruct((B, 1, N * hidden), f32),
        grid=(B // bt,),
        in_specs=[
            pl.BlockSpec((bt, N, dim_in), lambda i: (i, 0, 0)),       # x block
            pl.BlockSpec((bt, N, hidden), lambda i: (i, 0, 0)),       # state block
            pl.BlockSpec((N, embed_dim), lambda i: (0, 0)),           # node embeddings
            pl.BlockSpec((cheb_k - 1, N, N), lambda i: (0, 0, 0)),    # Chebyshev supports
            pl.BlockSpec((dkc, hidden), lambda i: (0, 0)),            # W_z (flat, bf16)
            pl.BlockSpec((dkc, hidden), lambda i: (0, 0)),            # W_r (flat, bf16)
            pl.BlockSpec((dkc, hidden), lambda i: (0, 0)),            # W_update (flat, bf16)
            pl.BlockSpec((N, hidden), lambda i: (0, 0)),              # b_z
            pl.BlockSpec((N, hidden), lambda i: (0, 0)),              # b_r
            pl.BlockSpec((N, hidden), lambda i: (0, 0)),              # b_update
        ],
        out_specs=pl.BlockSpec((bt, 1, N * hidden), lambda i: (i, 0, 0)),
        compiler_params=pltpu.CompilerParams(
            dimension_semantics=("parallel",),
            vmem_limit_bytes=32 * 1024 * 1024),
    )(x.astype(f32), state.astype(f32), E, S, wz, wr, wu, bz, br, bu)

    return h_flat.reshape(B, N, hidden)


# ---------------- pure-JAX reference (mirrors the PyTorch code) ----------------
def _avwgcn_ref(x, E, w_pool, b_pool, cheb_k):
    N = E.shape[0]
    supports = jax.nn.softmax(jnp.maximum(E @ E.T, 0.0), axis=1)
    sset = [jnp.eye(N, dtype=x.dtype), supports]
    for _ in range(2, cheb_k):
        sset.append(2.0 * supports @ sset[-1] - sset[-2])
    S = jnp.stack(sset, axis=0)                                   # (K, N, N)
    weights = jnp.einsum("nd,dkio->nkio", E, w_pool)              # (N, K, Cin, Cout)
    bias = E @ b_pool                                             # (N, Cout)
    x_g = jnp.einsum("knm,bmc->bknc", S, x).transpose(0, 2, 1, 3)
    return jnp.einsum("bnki,nkio->bno", x_g, weights) + bias


def agcrn_cell_ref(x, state, E, params, *, cheb_k):
    hidden = state.shape[-1]
    xs = jnp.concatenate([x, state], axis=-1)
    z_r = jax.nn.sigmoid(_avwgcn_ref(xs, E, params["gate_w"], params["gate_b"], cheb_k))
    z, r = z_r[..., :hidden], z_r[..., hidden:]
    cand = jnp.concatenate([x, z * state], axis=-1)
    hc = jnp.tanh(_avwgcn_ref(cand, E, params["update_w"], params["update_b"], cheb_k))
    return r * state + (1.0 - r) * hc


if __name__ == "__main__":
    B, N, dim_in, hidden, cheb_k, embed_dim = 2, 16, 4, 32, 3, 8
    key = jax.random.PRNGKey(0)
    ks = jax.random.split(key, 7)

    x = jax.random.normal(ks[0], (B, N, dim_in), jnp.float32)
    state = jax.random.normal(ks[1], (B, N, hidden), jnp.float32)
    node_embeddings = jax.random.normal(ks[2], (N, embed_dim), jnp.float32)

    params = {
        "gate_w": 0.1 * jax.random.normal(
            ks[3], (embed_dim, cheb_k, dim_in + hidden, 2 * hidden), jnp.float32),
        "gate_b": 0.1 * jax.random.normal(ks[4], (embed_dim, 2 * hidden), jnp.float32),
        "update_w": 0.1 * jax.random.normal(
            ks[5], (embed_dim, cheb_k, dim_in + hidden, hidden), jnp.float32),
        "update_b": 0.1 * jax.random.normal(ks[6], (embed_dim, hidden), jnp.float32),
    }

    h = agcrn_cell(x, state, node_embeddings, params, cheb_k=cheb_k)
    jax.block_until_ready(h)

    h_ref = agcrn_cell_ref(x, state, node_embeddings, params, cheb_k=cheb_k)
    assert h.shape == (B, N, hidden)
    # Relaxed tolerance vs. the pure-f32 reference: the in-kernel projection
    # matmuls run in bf16 on the MXU (f32 accumulation) per the perf guidance.
    err = float(jnp.max(jnp.abs(h - h_ref)))
    assert jnp.allclose(h, h_ref, atol=5e-2, rtol=5e-2), err

    print("KERNEL_OK")
</pallas_src>

<mosaic_0001>
module attributes {stable_mosaic.version = 11 : i64} {
  func.func @_agcrn_cell_kernel(%arg0: i32, %arg1: memref<1x16x4xf32, #tpu.memory_space<vmem>>, %arg2: memref<1x16x32xf32, #tpu.memory_space<vmem>>, %arg3: memref<16x8xf32, #tpu.memory_space<vmem>>, %arg4: memref<2x16x16xf32, #tpu.memory_space<vmem>>, %arg5: memref<864x32xbf16, #tpu.memory_space<vmem>>, %arg6: memref<864x32xbf16, #tpu.memory_space<vmem>>, %arg7: memref<864x32xbf16, #tpu.memory_space<vmem>>, %arg8: memref<16x32xf32, #tpu.memory_space<vmem>>, %arg9: memref<16x32xf32, #tpu.memory_space<vmem>>, %arg10: memref<16x32xf32, #tpu.memory_space<vmem>>, %arg11: memref<1x1x512xf32, #tpu.memory_space<vmem>>) attributes {dimension_semantics = [#tpu.dimension_semantics<parallel>], iteration_bounds = array<i64: 2>, scalar_prefetch = 0 : i64, scratch_operands = 0 : i64, tpu.core_type = #tpu.core_type<tc>, window_params = [{transform_indices = @transform_0, window_bounds = array<i64: 1, 16, 4>}, {transform_indices = @transform_1, window_bounds = array<i64: 1, 16, 32>}, {pipeline_mode = #tpu.pipeline_mode<synchronous>, transform_indices = @transform_2, window_bounds = array<i64: 16, 8>}, {pipeline_mode = #tpu.pipeline_mode<synchronous>, transform_indices = @transform_3, window_bounds = array<i64: 2, 16, 16>}, {pipeline_mode = #tpu.pipeline_mode<synchronous>, transform_indices = @transform_4, window_bounds = array<i64: 864, 32>}, {pipeline_mode = #tpu.pipeline_mode<synchronous>, transform_indices = @transform_5, window_bounds = array<i64: 864, 32>}, {pipeline_mode = #tpu.pipeline_mode<synchronous>, transform_indices = @transform_6, window_bounds = array<i64: 864, 32>}, {pipeline_mode = #tpu.pipeline_mode<synchronous>, transform_indices = @transform_7, window_bounds = array<i64: 16, 32>}, {pipeline_mode = #tpu.pipeline_mode<synchronous>, transform_indices = @transform_8, window_bounds = array<i64: 16, 32>}, {pipeline_mode = #tpu.pipeline_mode<synchronous>, transform_indices = @transform_9, window_bounds = array<i64: 16, 32>}, {transform_indices = @transform_10, window_bounds = array<i64: 1, 1, 512>}]} {
    %c0 = arith.constant 0 : index
    %c0_0 = arith.constant 0 : index
    %c0_1 = arith.constant 0 : index
    %0 = vector.load %arg1[%c0, %c0_0, %c0_1] : memref<1x16x4xf32, #tpu.memory_space<vmem>>, vector<1x16x4xf32>
    %c0_2 = arith.constant 0 : index
    %c0_3 = arith.constant 0 : index
    %c0_4 = arith.constant 0 : index
    %1 = vector.load %arg2[%c0_2, %c0_3, %c0_4] : memref<1x16x32xf32, #tpu.memory_space<vmem>>, vector<1x16x32xf32>
    %c0_5 = arith.constant 0 : index
    %c0_6 = arith.constant 0 : index
    %2 = vector.load %arg3[%c0_5, %c0_6] : memref<16x8xf32, #tpu.memory_space<vmem>>, vector<16x8xf32>
    %c0_7 = arith.constant 0 : index
    %c0_8 = arith.constant 0 : index
    %c0_9 = arith.constant 0 : index
    %3 = vector.load %arg4[%c0_7, %c0_8, %c0_9] : memref<2x16x16xf32, #tpu.memory_space<vmem>>, vector<2x16x16xf32>
    %4 = vector.shape_cast %0 : vector<1x16x4xf32> to vector<16x4xf32>
    %5 = vector.shape_cast %1 : vector<1x16x32xf32> to vector<16x32xf32>
    %6 = vector.extract_strided_slice %2 {offsets = [0, 0], sizes = [16, 1], strides = [1, 1]} : vector<16x8xf32> to vector<16x1xf32>
    %7 = vector.extract_strided_slice %2 {offsets = [0, 1], sizes = [16, 1], strides = [1, 1]} : vector<16x8xf32> to vector<16x1xf32>
    %8 = vector.extract_strided_slice %2 {offsets = [0, 2], sizes = [16, 1], strides = [1, 1]} : vector<16x8xf32> to vector<16x1xf32>
    %9 = vector.extract_strided_slice %2 {offsets = [0, 3], sizes = [16, 1], strides = [1, 1]} : vector<16x8xf32> to vector<16x1xf32>
    %10 = vector.extract_strided_slice %2 {offsets = [0, 4], sizes = [16, 1], strides = [1, 1]} : vector<16x8xf32> to vector<16x1xf32>
    %11 = vector.extract_strided_slice %2 {offsets = [0, 5], sizes = [16, 1], strides = [1, 1]} : vector<16x8xf32> to vector<16x1xf32>
    %12 = vector.extract_strided_slice %2 {offsets = [0, 6], sizes = [16, 1], strides = [1, 1]} : vector<16x8xf32> to vector<16x1xf32>
    %13 = vector.extract_strided_slice %2 {offsets = [0, 7], sizes = [16, 1], strides = [1, 1]} : vector<16x8xf32> to vector<16x1xf32>
    %c0_10 = arith.constant 0 : index
    %c0_11 = arith.constant 0 : index
    %14 = vector.load %arg8[%c0_10, %c0_11] : memref<16x32xf32, #tpu.memory_space<vmem>>, vector<16x32xf32>
    %c0_12 = arith.constant 0 : index
    %c0_13 = arith.constant 0 : index
    %15 = vector.load %arg9[%c0_12, %c0_13] : memref<16x32xf32, #tpu.memory_space<vmem>>, vector<16x32xf32>
    %c0_14 = arith.constant 0 : index
    %c0_15 = arith.constant 0 : index
    %16 = vector.load %arg10[%c0_14, %c0_15] : memref<16x32xf32, #tpu.memory_space<vmem>>, vector<16x32xf32>
    %17 = tpu.concatenate %0, %1 in 2 : vector<1x16x4xf32>, vector<1x16x32xf32> -> vector<1x16x36xf32>
    %18 = vector.shape_cast %17 : vector<1x16x36xf32> to vector<16x36xf32>
    %19 = vector.extract_strided_slice %3 {offsets = [0, 0, 0], sizes = [1, 16, 16], strides = [1, 1, 1]} : vector<2x16x16xf32> to vector<1x16x16xf32>
    %20 = vector.shape_cast %19 : vector<1x16x16xf32> to vector<16x16xf32>
    %cst = arith.constant dense<0.000000e+00> : vector<16x36xf32>
    %21 = tpu.matmul %20, %18, %cst {dimension_numbers = #tpu.dot_dimension_numbers<[1], [0], [0], [1], [0, 0, 1, 1], [], []>} : vector<16x16xf32>, vector<16x36xf32>, vector<16x36xf32> -> vector<16x36xf32>
    %22 = vector.extract_strided_slice %3 {offsets = [1, 0, 0], sizes = [1, 16, 16], strides = [1, 1, 1]} : vector<2x16x16xf32> to vector<1x16x16xf32>
    %23 = vector.shape_cast %22 : vector<1x16x16xf32> to vector<16x16xf32>
    %cst_16 = arith.constant dense<0.000000e+00> : vector<16x36xf32>
    %24 = tpu.matmul %23, %18, %cst_16 {dimension_numbers = #tpu.dot_dimension_numbers<[1], [0], [0], [1], [0, 0, 1, 1], [], []>} : vector<16x16xf32>, vector<16x36xf32>, vector<16x36xf32> -> vector<16x36xf32>
    %25 = tpu.concatenate %18, %21, %24 in 1 : vector<16x36xf32>, vector<16x36xf32>, vector<16x36xf32> -> vector<16x108xf32>
    %26 = vector.shape_cast %25 : vector<16x108xf32> to vector<1x16x108xf32>
    %27 = vector.shape_cast %26 : vector<1x16x108xf32> to vector<16x108xf32>
    %28 = vector.broadcast %6 : vector<16x1xf32> to vector<16x108xf32>
    %29 = arith.mulf %28, %27 : vector<16x108xf32>
    %30 = vector.broadcast %7 : vector<16x1xf32> to vector<16x108xf32>
    %31 = arith.mulf %30, %27 : vector<16x108xf32>
    %32 = vector.broadcast %8 : vector<16x1xf32> to vector<16x108xf32>
    %33 = arith.mulf %32, %27 : vector<16x108xf32>
    %34 = vector.broadcast %9 : vector<16x1xf32> to vector<16x108xf32>
    %35 = arith.mulf %34, %27 : vector<16x108xf32>
    %36 = vector.broadcast %10 : vector<16x1xf32> to vector<16x108xf32>
    %37 = arith.mulf %36, %27 : vector<16x108xf32>
    %38 = vector.broadcast %11 : vector<16x1xf32> to vector<16x108xf32>
    %39 = arith.mulf %38, %27 : vector<16x108xf32>
    %40 = vector.broadcast %12 : vector<16x1xf32> to vector<16x108xf32>
    %41 = arith.mulf %40, %27 : vector<16x108xf32>
    %42 = vector.broadcast %13 : vector<16x1xf32> to vector<16x108xf32>
    %43 = arith.mulf %42, %27 : vector<16x108xf32>
    %44 = tpu.concatenate %29, %31, %33, %35, %37, %39, %41, %43 in 1 : vector<16x108xf32>, vector<16x108xf32>, vector<16x108xf32>, vector<16x108xf32>, vector<16x108xf32>, vector<16x108xf32>, vector<16x108xf32>, vector<16x108xf32> -> vector<16x864xf32>
    %45 = arith.truncf %44 : vector<16x864xf32> to vector<16x864xbf16>
    %c0_17 = arith.constant 0 : index
    %c0_18 = arith.constant 0 : index
    %46 = vector.load %arg5[%c0_17, %c0_18] : memref<864x32xbf16, #tpu.memory_space<vmem>>, vector<864x32xbf16>
    %cst_19 = arith.constant dense<0.000000e+00> : vector<16x32xf32>
    %47 = tpu.matmul %45, %46, %cst_19 {dimension_numbers = #tpu.dot_dimension_numbers<[1], [0], [0], [1], [0, 0, 1, 1], [], []>} : vector<16x864xbf16>, vector<864x32xbf16>, vector<16x32xf32> -> vector<16x32xf32>
    %48 = arith.addf %47, %14 : vector<16x32xf32>
    %49 = arith.negf %48 : vector<16x32xf32>
    %50 = math.exp %49 : vector<16x32xf32>
    %cst_20 = arith.constant 1.000000e+00 : f32
    %51 = vector.broadcast %cst_20 : f32 to vector<16x32xf32>
    %52 = arith.addf %51, %50 : vector<16x32xf32>
    %53 = arith.divf %51, %52 : vector<16x32xf32>
    %c0_21 = arith.constant 0 : index
    %c0_22 = arith.constant 0 : index
    %54 = vector.load %arg6[%c0_21, %c0_22] : memref<864x32xbf16, #tpu.memory_space<vmem>>, vector<864x32xbf16>
    %cst_23 = arith.constant dense<0.000000e+00> : vector<16x32xf32>
    %55 = tpu.matmul %45, %54, %cst_23 {dimension_numbers = #tpu.dot_dimension_numbers<[1], [0], [0], [1], [0, 0, 1, 1], [], []>} : vector<16x864xbf16>, vector<864x32xbf16>, vector<16x32xf32> -> vector<16x32xf32>
    %56 = arith.addf %55, %15 : vector<16x32xf32>
    %57 = arith.negf %56 : vector<16x32xf32>
    %58 = math.exp %57 : vector<16x32xf32>
    %cst_24 = arith.constant 1.000000e+00 : f32
    %59 = vector.broadcast %cst_24 : f32 to vector<16x32xf32>
    %60 = arith.addf %59, %58 : vector<16x32xf32>
    %61 = arith.divf %59, %60 : vector<16x32xf32>
    %62 = arith.mulf %53, %5 : vector<16x32xf32>
    %63 = tpu.concatenate %4, %62 in 1 : vector<16x4xf32>, vector<16x32xf32> -> vector<16x36xf32>
    %64 = vector.shape_cast %63 : vector<16x36xf32> to vector<1x16x36xf32>
    %65 = vector.shape_cast %64 : vector<1x16x36xf32> to vector<16x36xf32>
    %66 = vector.extract_strided_slice %3 {offsets = [0, 0, 0], sizes = [1, 16, 16], strides = [1, 1, 1]} : vector<2x16x16xf32> to vector<1x16x16xf32>
    %67 = vector.shape_cast %66 : vector<1x16x16xf32> to vector<16x16xf32>
    %cst_25 = arith.constant dense<0.000000e+00> : vector<16x36xf32>
    %68 = tpu.matmul %67, %65, %cst_25 {dimension_numbers = #tpu.dot_dimension_numbers<[1], [0], [0], [1], [0, 0, 1, 1], [], []>} : vector<16x16xf32>, vector<16x36xf32>, vector<16x36xf32> -> vector<16x36xf32>
    %69 = vector.extract_strided_slice %3 {offsets = [1, 0, 0], sizes = [1, 16, 16], strides = [1, 1, 1]} : vector<2x16x16xf32> to vector<1x16x16xf32>
    %70 = vector.shape_cast %69 : vector<1x16x16xf32> to vector<16x16xf32>
    %cst_26 = arith.constant dense<0.000000e+00> : vector<16x36xf32>
    %71 = tpu.matmul %70, %65, %cst_26 {dimension_numbers = #tpu.dot_dimension_numbers<[1], [0], [0], [1], [0, 0, 1, 1], [], []>} : vector<16x16xf32>, vector<16x36xf32>, vector<16x36xf32> -> vector<16x36xf32>
    %72 = tpu.concatenate %65, %68, %71 in 1 : vector<16x36xf32>, vector<16x36xf32>, vector<16x36xf32> -> vector<16x108xf32>
    %73 = vector.shape_cast %72 : vector<16x108xf32> to vector<1x16x108xf32>
    %74 = vector.shape_cast %73 : vector<1x16x108xf32> to vector<16x108xf32>
    %75 = vector.broadcast %6 : vector<16x1xf32> to vector<16x108xf32>
    %76 = arith.mulf %75, %74 : vector<16x108xf32>
    %77 = vector.broadcast %7 : vector<16x1xf32> to vector<16x108xf32>
    %78 = arith.mulf %77, %74 : vector<16x108xf32>
    %79 = vector.broadcast %8 : vector<16x1xf32> to vector<16x108xf32>
    %80 = arith.mulf %79, %74 : vector<16x108xf32>
    %81 = vector.broadcast %9 : vector<16x1xf32> to vector<16x108xf32>
    %82 = arith.mulf %81, %74 : vector<16x108xf32>
    %83 = vector.broadcast %10 : vector<16x1xf32> to vector<16x108xf32>
    %84 = arith.mulf %83, %74 : vector<16x108xf32>
    %85 = vector.broadcast %11 : vector<16x1xf32> to vector<16x108xf32>
    %86 = arith.mulf %85, %74 : vector<16x108xf32>
    %87 = vector.broadcast %12 : vector<16x1xf32> to vector<16x108xf32>
    %88 = arith.mulf %87, %74 : vector<16x108xf32>
    %89 = vector.broadcast %13 : vector<16x1xf32> to vector<16x108xf32>
    %90 = arith.mulf %89, %74 : vector<16x108xf32>
    %91 = tpu.concatenate %76, %78, %80, %82, %84, %86, %88, %90 in 1 : vector<16x108xf32>, vector<16x108xf32>, vector<16x108xf32>, vector<16x108xf32>, vector<16x108xf32>, vector<16x108xf32>, vector<16x108xf32>, vector<16x108xf32> -> vector<16x864xf32>
    %92 = arith.truncf %91 : vector<16x864xf32> to vector<16x864xbf16>
    %c0_27 = arith.constant 0 : index
    %c0_28 = arith.constant 0 : index
    %93 = vector.load %arg7[%c0_27, %c0_28] : memref<864x32xbf16, #tpu.memory_space<vmem>>, vector<864x32xbf16>
    %cst_29 = arith.constant dense<0.000000e+00> : vector<16x32xf32>
    %94 = tpu.matmul %92, %93, %cst_29 {dimension_numbers = #tpu.dot_dimension_numbers<[1], [0], [0], [1], [0, 0, 1, 1], [], []>} : vector<16x864xbf16>, vector<864x32xbf16>, vector<16x32xf32> -> vector<16x32xf32>
    %95 = arith.addf %94, %16 : vector<16x32xf32>
    %96 = math.tanh %95 : vector<16x32xf32>
    %97 = arith.mulf %61, %5 : vector<16x32xf32>
    %cst_30 = arith.constant 1.000000e+00 : f32
    %98 = vector.broadcast %cst_30 : f32 to vector<16x32xf32>
    %99 = arith.subf %98, %61 : vector<16x32xf32>
    %100 = arith.mulf %99, %96 : vector<16x32xf32>
    %101 = arith.addf %97, %100 : vector<16x32xf32>
    %102 = vector.shape_cast %101 : vector<16x32xf32> to vector<1x16x32xf32>
    %103 = vector.extract_strided_slice %102 {offsets = [0, 0, 0], sizes = [1, 1, 32], strides = [1, 1, 1]} : vector<1x16x32xf32> to vector<1x1x32xf32>
    %104 = vector.shape_cast %103 : vector<1x1x32xf32> to vector<1x32xf32>
    %105 = vector.extract_strided_slice %102 {offsets = [0, 1, 0], sizes = [1, 1, 32], strides = [1, 1, 1]} : vector<1x16x32xf32> to vector<1x1x32xf32>
    %106 = vector.shape_cast %105 : vector<1x1x32xf32> to vector<1x32xf32>
    %107 = vector.extract_strided_slice %102 {offsets = [0, 2, 0], sizes = [1, 1, 32], strides = [1, 1, 1]} : vector<1x16x32xf32> to vector<1x1x32xf32>
    %108 = vector.shape_cast %107 : vector<1x1x32xf32> to vector<1x32xf32>
    %109 = vector.extract_strided_slice %102 {offsets = [0, 3, 0], sizes = [1, 1, 32], strides = [1, 1, 1]} : vector<1x16x32xf32> to vector<1x1x32xf32>
    %110 = vector.shape_cast %109 : vector<1x1x32xf32> to vector<1x32xf32>
    %111 = vector.extract_strided_slice %102 {offsets = [0, 4, 0], sizes = [1, 1, 32], strides = [1, 1, 1]} : vector<1x16x32xf32> to vector<1x1x32xf32>
    %112 = vector.shape_cast %111 : vector<1x1x32xf32> to vector<1x32xf32>
    %113 = vector.extract_strided_slice %102 {offsets = [0, 5, 0], sizes = [1, 1, 32], strides = [1, 1, 1]} : vector<1x16x32xf32> to vector<1x1x32xf32>
    %114 = vector.shape_cast %113 : vector<1x1x32xf32> to vector<1x32xf32>
    %115 = vector.extract_strided_slice %102 {offsets = [0, 6, 0], sizes = [1, 1, 32], strides = [1, 1, 1]} : vector<1x16x32xf32> to vector<1x1x32xf32>
    %116 = vector.shape_cast %115 : vector<1x1x32xf32> to vector<1x32xf32>
    %117 = vector.extract_strided_slice %102 {offsets = [0, 7, 0], sizes = [1, 1, 32], strides = [1, 1, 1]} : vector<1x16x32xf32> to vector<1x1x32xf32>
    %118 = vector.shape_cast %117 : vector<1x1x32xf32> to vector<1x32xf32>
    %119 = vector.extract_strided_slice %102 {offsets = [0, 8, 0], sizes = [1, 1, 32], strides = [1, 1, 1]} : vector<1x16x32xf32> to vector<1x1x32xf32>
    %120 = vector.shape_cast %119 : vector<1x1x32xf32> to vector<1x32xf32>
    %121 = vector.extract_strided_slice %102 {offsets = [0, 9, 0], sizes = [1, 1, 32], strides = [1, 1, 1]} : vector<1x16x32xf32> to vector<1x1x32xf32>
    %122 = vector.shape_cast %121 : vector<1x1x32xf32> to vector<1x32xf32>
    %123 = vector.extract_strided_slice %102 {offsets = [0, 10, 0], sizes = [1, 1, 32], strides = [1, 1, 1]} : vector<1x16x32xf32> to vector<1x1x32xf32>
    %124 = vector.shape_cast %123 : vector<1x1x32xf32> to vector<1x32xf32>
    %125 = vector.extract_strided_slice %102 {offsets = [0, 11, 0], sizes = [1, 1, 32], strides = [1, 1, 1]} : vector<1x16x32xf32> to vector<1x1x32xf32>
    %126 = vector.shape_cast %125 : vector<1x1x32xf32> to vector<1x32xf32>
    %127 = vector.extract_strided_slice %102 {offsets = [0, 12, 0], sizes = [1, 1, 32], strides = [1, 1, 1]} : vector<1x16x32xf32> to vector<1x1x32xf32>
    %128 = vector.shape_cast %127 : vector<1x1x32xf32> to vector<1x32xf32>
    %129 = vector.extract_strided_slice %102 {offsets = [0, 13, 0], sizes = [1, 1, 32], strides = [1, 1, 1]} : vector<1x16x32xf32> to vector<1x1x32xf32>
    %130 = vector.shape_cast %129 : vector<1x1x32xf32> to vector<1x32xf32>
    %131 = vector.extract_strided_slice %102 {offsets = [0, 14, 0], sizes = [1, 1, 32], strides = [1, 1, 1]} : vector<1x16x32xf32> to vector<1x1x32xf32>
    %132 = vector.shape_cast %131 : vector<1x1x32xf32> to vector<1x32xf32>
    %133 = vector.extract_strided_slice %102 {offsets = [0, 15, 0], sizes = [1, 1, 32], strides = [1, 1, 1]} : vector<1x16x32xf32> to vector<1x1x32xf32>
    %134 = vector.shape_cast %133 : vector<1x1x32xf32> to vector<1x32xf32>
    %135 = tpu.concatenate %104, %106, %108, %110, %112, %114, %116, %118, %120, %122, %124, %126, %128, %130, %132, %134 in 1 : vector<1x32xf32>, vector<1x32xf32>, vector<1x32xf32>, vector<1x32xf32>, vector<1x32xf32>, vector<1x32xf32>, vector<1x32xf32>, vector<1x32xf32>, vector<1x32xf32>, vector<1x32xf32>, vector<1x32xf32>, vector<1x32xf32>, vector<1x32xf32>, vector<1x32xf32>, vector<1x32xf32>, vector<1x32xf32> -> vector<1x512xf32>
    %136 = vector.shape_cast %135 : vector<1x512xf32> to vector<1x1x512xf32>
    %c0_31 = arith.constant 0 : index
    %c0_32 = arith.constant 0 : index
    %c0_33 = arith.constant 0 : index
    %137 = vector.load %arg11[%c0_31, %c0_32, %c0_33] : memref<1x1x512xf32, #tpu.memory_space<vmem>>, vector<1x1x512xf32>
    tpu.vector_store %arg11[%c0_31, %c0_32, %c0_33], %136 {strides = array<i32>} : memref<1x1x512xf32, #tpu.memory_space<vmem>>, vector<1x1x512xf32>,
    return
  }
  func.func @transform_0(%arg0: i32) -> (i32, i32, i32) {
    %c0_i32 = arith.constant 0 : i32
    %c0_i32_0 = arith.constant 0 : i32
    %c0_i32_1 = arith.constant 0 : i32
    return %arg0, %c0_i32, %c0_i32_0 : i32, i32, i32
  }
  func.func @transform_1(%arg0: i32) -> (i32, i32, i32) {
    %c0_i32 = arith.constant 0 : i32
    %c0_i32_0 = arith.constant 0 : i32
    %c0_i32_1 = arith.constant 0 : i32
    return %arg0, %c0_i32, %c0_i32_0 : i32, i32, i32
  }
  func.func @transform_2(%arg0: i32) -> (i32, i32) {
    %c0_i32 = arith.constant 0 : i32
    %c0_i32_0 = arith.constant 0 : i32
    %c0_i32_1 = arith.constant 0 : i32
    return %c0_i32, %c0_i32_0 : i32, i32
  }
  func.func @transform_3(%arg0: i32) -> (i32, i32, i32) {
    %c0_i32 = arith.constant 0 : i32
    %c0_i32_0 = arith.constant 0 : i32
    %c0_i32_1 = arith.constant 0 : i32
    %c0_i32_2 = arith.constant 0 : i32
    return %c0_i32, %c0_i32_0, %c0_i32_1 : i32, i32, i32
  }
  func.func @transform_4(%arg0: i32) -> (i32, i32) {
    %c0_i32 = arith.constant 0 : i32
    %c0_i32_0 = arith.constant 0 : i32
    %c0_i32_1 = arith.constant 0 : i32
    return %c0_i32, %c0_i32_0 : i32, i32
  }
  func.func @transform_5(%arg0: i32) -> (i32, i32) {
    %c0_i32 = arith.constant 0 : i32
    %c0_i32_0 = arith.constant 0 : i32
    %c0_i32_1 = arith.constant 0 : i32
    return %c0_i32, %c0_i32_0 : i32, i32
  }
  func.func @transform_6(%arg0: i32) -> (i32, i32) {
    %c0_i32 = arith.constant 0 : i32
    %c0_i32_0 = arith.constant 0 : i32
    %c0_i32_1 = arith.constant 0 : i32
    return %c0_i32, %c0_i32_0 : i32, i32
  }
  func.func @transform_7(%arg0: i32) -> (i32, i32) {
    %c0_i32 = arith.constant 0 : i32
    %c0_i32_0 = arith.constant 0 : i32
    %c0_i32_1 = arith.constant 0 : i32
    return %c0_i32, %c0_i32_0 : i32, i32
  }
  func.func @transform_8(%arg0: i32) -> (i32, i32) {
    %c0_i32 = arith.constant 0 : i32
    %c0_i32_0 = arith.constant 0 : i32
    %c0_i32_1 = arith.constant 0 : i32
    return %c0_i32, %c0_i32_0 : i32, i32
  }
  func.func @transform_9(%arg0: i32) -> (i32, i32) {
    %c0_i32 = arith.constant 0 : i32
    %c0_i32_0 = arith.constant 0 : i32
    %c0_i32_1 = arith.constant 0 : i32
    return %c0_i32, %c0_i32_0 : i32, i32
  }
  func.func @transform_10(%arg0: i32) -> (i32, i32, i32) {
    %c0_i32 = arith.constant 0 : i32
    %c0_i32_0 = arith.constant 0 : i32
    %c0_i32_1 = arith.constant 0 : i32
    return %arg0, %c0_i32, %c0_i32_0 : i32, i32, i32
  }
}

</mosaic_0001>

<llo_original>
// kernel: tpu_custom_call.1
$region0: #{tpu_custom_call.1}
  #allocation0 [shape = 'u32[]', space=smem, size = 0x4, offset = 0x4, fixed_abs, tag = 'smem constant byte address 0x4 - core index']
  #allocation1 [shape = 'u32[144,128]{1,0:T(1,128)}', space=vmem, size = 0x12000, scoped, tag = 'internal scratch']
  %s0 = inlined_call_operand.vmem [shape: f32[2,16,4], index: 0, kind: input, shape index: {}]
  %s1 = inlined_call_operand.vmem [shape: f32[2,16,32], index: 1, kind: input, shape index: {}]
  %s2 = inlined_call_operand.vmem [shape: f32[16,8], index: 2, kind: input, shape index: {}]
  %s3 = inlined_call_operand.vmem [shape: f32[2,16,16], index: 3, kind: input, shape index: {}]
  %s4 = inlined_call_operand.vmem [shape: bf16[864,32], index: 4, kind: input, shape index: {}]
  %s5 = inlined_call_operand.vmem [shape: bf16[864,32], index: 5, kind: input, shape index: {}]
  %s6 = inlined_call_operand.vmem [shape: bf16[864,32], index: 6, kind: input, shape index: {}]
  %s7 = inlined_call_operand.vmem [shape: f32[16,32], index: 7, kind: input, shape index: {}]
  %s8 = inlined_call_operand.vmem [shape: f32[16,32], index: 8, kind: input, shape index: {}]
  %s9 = inlined_call_operand.vmem [shape: f32[16,32], index: 9, kind: input, shape index: {}]
  %s10 = inlined_call_operand.hbm [shape: f32[2,1,512], index: 10, kind: output, shape index: {}]
  %s11 = sld [smem:[#allocation0]]
  $region73: #{tpu_custom_call.1} parent=0
    _
  %s13 = ssub.s32 1, %s11
  %s14 = scalar_select 0, %s13, %s11
  $region1: #{tpu_custom_call.1} parent=0
    #allocation2 [shape = 'u8[4096]{0}', space=vmem, size = 0x1000, scoped, tag = 'output window, operand 0']
    #allocation3 [shape = 's32[2]{0}', space=sflag, size = 0x8, scoped, tag = 'scoped memory for tpu_custom_call.1']
    %15 = vsyncpa [#allocation3], 0
    %s16 = scalar_lea.sflag [#allocation3], 1
    %17 = vsyncpa %s16, 0
    loop: start=0, step=1, limit=4
    $region2: #{tpu_custom_call.1} parent=1 // loop_pre_header
      _
    $region3: #{tpu_custom_call.1} parent=1 // loop_header
      %s19 = sphi 0, %s23
      %p20 = scmp.ge.s32.totalorder %s19, 4
      %s29 = sphi 0, %s31
      %s32 = sphi 0, %s29
      %s33 = sphi 0, %s32
      %s49 = sphi 0, %s33
      %s55 = sphi 0, %s57
      %s58 = sphi 0, %s55
      %s59 = sphi 0, %s58
      %s75 = sphi 0, %s59
      %s79 = sphi 0, %s79
      %s81 = sphi 0, %s79
      %s82 = sphi 0, %s81
      %s96 = sphi 0, %s82
      %s100 = sphi 0, %s100
      %s102 = sphi 0, %s100
      %s103 = sphi 0, %s102
      %s117 = sphi 0, %s103
      %s121 = sphi 0, %s121
      %s123 = sphi 0, %s121
      %s124 = sphi 0, %s123
      %s138 = sphi 0, %s124
      %s142 = sphi 0, %s142
      %s144 = sphi 0, %s142
      %s145 = sphi 0, %s144
      %s159 = sphi 0, %s145
      %s163 = sphi 0, %s163
      %s165 = sphi 0, %s163
      %s166 = sphi 0, %s165
      %s180 = sphi 0, %s166
      %s184 = sphi 0, %s184
      %s186 = sphi 0, %s184
      %s187 = sphi 0, %s186
      %s201 = sphi 0, %s187
      %s205 = sphi 0, %s205
      %s207 = sphi 0, %s205
      %s208 = sphi 0, %s207
      %s222 = sphi 0, %s208
      %s226 = sphi 0, %s226
      %s228 = sphi 0, %s226
      %s229 = sphi 0, %s228
      %s243 = sphi 0, %s229
      %s249 = sphi 0, %s251
      %s252 = sphi 0, %s249
      %s253 = sphi 0, %s252
      %s269 = sphi 0, %s253
    $region4: #{tpu_custom_call.1} parent=1 // loop_header_branch
      %22 = sbr.rel (%p20) target = $region8
    $region5: #{tpu_custom_call.1} parent=1 // loop_body
      %s24 = ssub.s32 %s19, 1
      %s25 = ssub.s32 %s19, 2
      %s26 = sadd.s32 %s19, 1
      %s27 = ssub.s32 %s19, %s26
      %p28 = scmp.eq.s32.totalorder %s27, 0
      %s30 = sadd.s32 %s29, 1
      %s31 = scalar_select %p28, %s29, %s30
      %p34 = pneg %p28
      %p35 = scmp.eq.s32.totalorder %s19, 1
      %p36 = por %p34, %p35
      %p37 = scmp.ne.s32.totalorder %s29, %s32
      %p38 = scmp.eq.s32.totalorder %s19, 0
      %p39 = por %p37, %p38
      %p40 = scmp.ne.s32.totalorder %s29, %s32
      %p41 = scmp.eq.s32.totalorder %s24, 1
      %p42 = por %p40, %p41
      %p43 = scmp.ne.s32.totalorder %s32, %s33
      %p44 = scmp.eq.s32.totalorder %s24, 0
      %p45 = por %p43, %p44
      %p46 = scmp.ne.s32.totalorder %s32, %s33
      %p47 = scmp.eq.s32.totalorder %s25, 1
      %p48 = por %p46, %p47
      %p50 = scmp.ne.s32.totalorder %s33, %s49
      %p51 = scmp.eq.s32.totalorder %s25, 0
      %p52 = por %p50, %p51
      %s53 = ssub.s32 %s19, %s26
      %p54 = scmp.eq.s32.totalorder %s53, 0
      %s56 = sadd.s32 %s55, 1
      %s57 = scalar_select %p54, %s55, %s56
      %p60 = pneg %p54
      %p61 = scmp.eq.s32.totalorder %s19, 1
      %p62 = por %p60, %p61
      %p63 = scmp.ne.s32.totalorder %s55, %s58
      %p64 = scmp.eq.s32.totalorder %s19, 0
      %p65 = por %p63, %p64
      %p66 = scmp.ne.s32.totalorder %s55, %s58
      %p67 = scmp.eq.s32.totalorder %s24, 1
      %p68 = por %p66, %p67
      %p69 = scmp.ne.s32.totalorder %s58, %s59
      %p70 = scmp.eq.s32.totalorder %s24, 0
      %p71 = por %p69, %p70
      %p72 = scmp.ne.s32.totalorder %s58, %s59
      %p73 = scmp.eq.s32.totalorder %s25, 1
      %p74 = por %p72, %p73
      %p76 = scmp.ne.s32.totalorder %s59, %s75
      %p77 = scmp.eq.s32.totalorder %s25, 0
      %p78 = por %p76, %p77
      %s80 = sadd.s32 %s79, 1
      %p83 = scmp.eq.s32.totalorder %s19, 1
      %p84 = scmp.ne.s32.totalorder %s79, %s81
      %p85 = scmp.eq.s32.totalorder %s19, 0
      %p86 = por %p84, %p85
      %p87 = scmp.ne.s32.totalorder %s79, %s81
      %p88 = scmp.eq.s32.totalorder %s24, 1
      %p89 = por %p87, %p88
      %p90 = scmp.ne.s32.totalorder %s81, %s82
      %p91 = scmp.eq.s32.totalorder %s24, 0
      %p92 = por %p90, %p91
      %p93 = scmp.ne.s32.totalorder %s81, %s82
      %p94 = scmp.eq.s32.totalorder %s25, 1
      %p95 = por %p93, %p94
      %p97 = scmp.ne.s32.totalorder %s82, %s96
      %p98 = scmp.eq.s32.totalorder %s25, 0
      %p99 = por %p97, %p98
      %s101 = sadd.s32 %s100, 1
      %p104 = scmp.eq.s32.totalorder %s19, 1
      %p105 = scmp.ne.s32.totalorder %s100, %s102
      %p106 = scmp.eq.s32.totalorder %s19, 0
      %p107 = por %p105, %p106
      %p108 = scmp.ne.s32.totalorder %s100, %s102
      %p109 = scmp.eq.s32.totalorder %s24, 1
      %p110 = por %p108, %p109
      %p111 = scmp.ne.s32.totalorder %s102, %s103
      %p112 = scmp.eq.s32.totalorder %s24, 0
      %p113 = por %p111, %p112
      %p114 = scmp.ne.s32.totalorder %s102, %s103
      %p115 = scmp.eq.s32.totalorder %s25, 1
      %p116 = por %p114, %p115
      %p118 = scmp.ne.s32.totalorder %s103, %s117
      %p119 = scmp.eq.s32.totalorder %s25, 0
      %p120 = por %p118, %p119
      %s122 = sadd.s32 %s121, 1
      %p125 = scmp.eq.s32.totalorder %s19, 1
      %p126 = scmp.ne.s32.totalorder %s121, %s123
      %p127 = scmp.eq.s32.totalorder %s19, 0
      %p128 = por %p126, %p127
      %p129 = scmp.ne.s32.totalorder %s121, %s123
      %p130 = scmp.eq.s32.totalorder %s24, 1
      %p131 = por %p129, %p130
      %p132 = scmp.ne.s32.totalorder %s123, %s124
      %p133 = scmp.eq.s32.totalorder %s24, 0
      %p134 = por %p132, %p133
      %p135 = scmp.ne.s32.totalorder %s123, %s124
      %p136 = scmp.eq.s32.totalorder %s25, 1
      %p137 = por %p135, %p136
      %p139 = scmp.ne.s32.totalorder %s124, %s138
      %p140 = scmp.eq.s32.totalorder %s25, 0
      %p141 = por %p139, %p140
      %s143 = sadd.s32 %s142, 1
      %p146 = scmp.eq.s32.totalorder %s19, 1
      %p147 = scmp.ne.s32.totalorder %s142, %s144
      %p148 = scmp.eq.s32.totalorder %s19, 0
      %p149 = por %p147, %p148
      %p150 = scmp.ne.s32.totalorder %s142, %s144
      %p151 = scmp.eq.s32.totalorder %s24, 1
      %p152 = por %p150, %p151
      %p153 = scmp.ne.s32.totalorder %s144, %s145
      %p154 = scmp.eq.s32.totalorder %s24, 0
      %p155 = por %p153, %p154
      %p156 = scmp.ne.s32.totalorder %s144, %s145
      %p157 = scmp.eq.s32.totalorder %s25, 1
      %p158 = por %p156, %p157
      %p160 = scmp.ne.s32.totalorder %s145, %s159
      %p161 = scmp.eq.s32.totalorder %s25, 0
      %p162 = por %p160, %p161
      %s164 = sadd.s32 %s163, 1
      %p167 = scmp.eq.s32.totalorder %s19, 1
      %p168 = scmp.ne.s32.totalorder %s163, %s165
      %p169 = scmp.eq.s32.totalorder %s19, 0
      %p170 = por %p168, %p169
      %p171 = scmp.ne.s32.totalorder %s163, %s165
      %p172 = scmp.eq.s32.totalorder %s24, 1
      %p173 = por %p171, %p172
      %p174 = scmp.ne.s32.totalorder %s165, %s166
      %p175 = scmp.eq.s32.totalorder %s24, 0
      %p176 = por %p174, %p175
      %p177 = scmp.ne.s32.totalorder %s165, %s166
      %p178 = scmp.eq.s32.totalorder %s25, 1
      %p179 = por %p177, %p178
      %p181 = scmp.ne.s32.totalorder %s166, %s180
      %p182 = scmp.eq.s32.totalorder %s25, 0
      %p183 = por %p181, %p182
      %s185 = sadd.s32 %s184, 1
      %p188 = scmp.eq.s32.totalorder %s19, 1
      %p189 = scmp.ne.s32.totalorder %s184, %s186
      %p190 = scmp.eq.s32.totalorder %s19, 0
      %p191 = por %p189, %p190
      %p192 = scmp.ne.s32.totalorder %s184, %s186
      %p193 = scmp.eq.s32.totalorder %s24, 1
      %p194 = por %p192, %p193
      %p195 = scmp.ne.s32.totalorder %s186, %s187
      %p196 = scmp.eq.s32.totalorder %s24, 0
      %p197 = por %p195, %p196
      %p198 = scmp.ne.s32.totalorder %s186, %s187
      %p199 = scmp.eq.s32.totalorder %s25, 1
      %p200 = por %p198, %p199
      %p202 = scmp.ne.s32.totalorder %s187, %s201
      %p203 = scmp.eq.s32.totalorder %s25, 0
      %p204 = por %p202, %p203
      %s206 = sadd.s32 %s205, 1
      %p209 = scmp.eq.s32.totalorder %s19, 1
      %p210 = scmp.ne.s32.totalorder %s205, %s207
      %p211 = scmp.eq.s32.totalorder %s19, 0
      %p212 = por %p210, %p211
      %p213 = scmp.ne.s32.totalorder %s205, %s207
      %p214 = scmp.eq.s32.totalorder %s24, 1
      %p215 = por %p213, %p214
      %p216 = scmp.ne.s32.totalorder %s207, %s208
      %p217 = scmp.eq.s32.totalorder %s24, 0
      %p218 = por %p216, %p217
      %p219 = scmp.ne.s32.totalorder %s207, %s208
      %p220 = scmp.eq.s32.totalorder %s25, 1
      %p221 = por %p219, %p220
      %p223 = scmp.ne.s32.totalorder %s208, %s222
      %p224 = scmp.eq.s32.totalorder %s25, 0
      %p225 = por %p223, %p224
      %s227 = sadd.s32 %s226, 1
      %p230 = scmp.eq.s32.totalorder %s19, 1
      %p231 = scmp.ne.s32.totalorder %s226, %s228
      %p232 = scmp.eq.s32.totalorder %s19, 0
      %p233 = por %p231, %p232
      %p234 = scmp.ne.s32.totalorder %s226, %s228
      %p235 = scmp.eq.s32.totalorder %s24, 1
      %p236 = por %p234, %p235
      %p237 = scmp.ne.s32.totalorder %s228, %s229
      %p238 = scmp.eq.s32.totalorder %s24, 0
      %p239 = por %p237, %p238
      %p240 = scmp.ne.s32.totalorder %s228, %s229
      %p241 = scmp.eq.s32.totalorder %s25, 1
      %p242 = por %p240, %p241
      %p244 = scmp.ne.s32.totalorder %s229, %s243
      %p245 = scmp.eq.s32.totalorder %s25, 0
      %p246 = por %p244, %p245
      %s247 = ssub.s32 %s19, %s26
      %p248 = scmp.eq.s32.totalorder %s247, 0
      %s250 = sadd.s32 %s249, 1
      %s251 = scalar_select %p248, %s249, %s250
      %p254 = pneg %p248
      %p255 = scmp.eq.s32.totalorder %s19, 1
      %p256 = por %p254, %p255
      %p257 = scmp.ne.s32.totalorder %s249, %s252
      %p258 = scmp.eq.s32.totalorder %s19, 0
      %p259 = por %p257, %p258
      %p260 = scmp.ne.s32.totalorder %s249, %s252
      %p261 = scmp.eq.s32.totalorder %s24, 1
      %p262 = por %p260, %p261
      %p263 = scmp.ne.s32.totalorder %s252, %s253
      %p264 = scmp.eq.s32.totalorder %s24, 0
      %p265 = por %p263, %p264
      %p266 = scmp.ne.s32.totalorder %s252, %s253
      %p267 = scmp.eq.s32.totalorder %s25, 1
      %p268 = por %p266, %p267
      %p270 = scmp.ne.s32.totalorder %s253, %s269
      %p271 = scmp.eq.s32.totalorder %s25, 0
      %p272 = por %p270, %p271
      %p273 = scmp.le.s32.totalorder 1, %s19
      %p274 = scmp.lt.s32.totalorder %s19, 3
      %p275 = pnand %p273, %p274
      %p276 = pneg %p275
      // Predicated region
      $region9: #{tpu_custom_call.1} parent=5 // pred_check
        _
      $region10: #{tpu_custom_call.1} parent=5 // pred_check_branch
        %278 = sbr.rel (%p275) target = $region12
      $region11: #{tpu_custom_call.1} parent=5 // pred_region
        %s279 = ssub.s32 %s19, 1
        // Predicated region
        $region13: #{tpu_custom_call.1} parent=11 // pred_check
          %p280 = pneg %p92
        $region14: #{tpu_custom_call.1} parent=11 // pred_check_branch
          %282 = sbr.rel (%p280) target = $region16
        $region15: #{tpu_custom_call.1} parent=11 // pred_region
          _
        $region16: #{tpu_custom_call.1} parent=11 // pred_fallthru
          _
        // Predicated region
        $region17: #{tpu_custom_call.1} parent=11 // pred_check
          %p283 = pneg %p113
        $region18: #{tpu_custom_call.1} parent=11 // pred_check_branch
          %285 = sbr.rel (%p283) target = $region20
        $region19: #{tpu_custom_call.1} parent=11 // pred_region
          _
        $region20: #{tpu_custom_call.1} parent=11 // pred_fallthru
          _
        // Predicated region
        $region21: #{tpu_custom_call.1} parent=11 // pred_check
          %p286 = pneg %p134
        $region22: #{tpu_custom_call.1} parent=11 // pred_check_branch
          %288 = sbr.rel (%p286) target = $region24
        $region23: #{tpu_custom_call.1} parent=11 // pred_region
          _
        $region24: #{tpu_custom_call.1} parent=11 // pred_fallthru
          _
        // Predicated region
        $region25: #{tpu_custom_call.1} parent=11 // pred_check
          %p289 = pneg %p155
        $region26: #{tpu_custom_call.1} parent=11 // pred_check_branch
          %291 = sbr.rel (%p289) target = $region28
        $region27: #{tpu_custom_call.1} parent=11 // pred_region
          _
        $region28: #{tpu_custom_call.1} parent=11 // pred_fallthru
          _
        // Predicated region
        $region29: #{tpu_custom_call.1} parent=11 // pred_check
          %p292 = pneg %p176
        $region30: #{tpu_custom_call.1} parent=11 // pred_check_branch
          %294 = sbr.rel (%p292) target = $region32
        $region31: #{tpu_custom_call.1} parent=11 // pred_region
          _
        $region32: #{tpu_custom_call.1} parent=11 // pred_fallthru
          _
        // Predicated region
        $region33: #{tpu_custom_call.1} parent=11 // pred_check
          %p295 = pneg %p197
        $region34: #{tpu_custom_call.1} parent=11 // pred_check_branch
          %297 = sbr.rel (%p295) target = $region36
        $region35: #{tpu_custom_call.1} parent=11 // pred_region
          _
        $region36: #{tpu_custom_call.1} parent=11 // pred_fallthru
          _
        // Predicated region
        $region37: #{tpu_custom_call.1} parent=11 // pred_check
          %p298 = pneg %p218
        $region38: #{tpu_custom_call.1} parent=11 // pred_check_branch
          %300 = sbr.rel (%p298) target = $region40
        $region39: #{tpu_custom_call.1} parent=11 // pred_region
          _
        $region40: #{tpu_custom_call.1} parent=11 // pred_fallthru
          _
        // Predicated region
        $region41: #{tpu_custom_call.1} parent=11 // pred_check
          %p301 = pneg %p239
        $region42: #{tpu_custom_call.1} parent=11 // pred_check_branch
          %303 = sbr.rel (%p301) target = $region44
        $region43: #{tpu_custom_call.1} parent=11 // pred_region
          _
        $region44: #{tpu_custom_call.1} parent=11 // pred_fallthru
          _
      $region12: #{tpu_custom_call.1} parent=5 // pred_fallthru
        _
      %p304 = scmp.lt.s32.totalorder %s19, 2
      // Predicated region
      $region45: #{tpu_custom_call.1} parent=5 // pred_check
        %p305 = pneg %p304
      $region46: #{tpu_custom_call.1} parent=5 // pred_check_branch
        %307 = sbr.rel (%p305) target = $region48
      $region47: #{tpu_custom_call.1} parent=5 // pred_region
        // Predicated region
        $region49: #{tpu_custom_call.1} parent=47 // pred_check
          %p308 = pneg %p39
        $region50: #{tpu_custom_call.1} parent=47 // pred_check_branch
          %310 = sbr.rel (%p308) target = $region52
        $region51: #{tpu_custom_call.1} parent=47 // pred_region
          %p311 = scmp.lt.s32.totalorder %s19, 1
          %s312 = scalar_select %p311, %s19, 1
          %s313 = smul.addr %s312, 2
          %s314 = smul.addr %s313, 8
          %s315 = scalar_lea.vmem %s0, %s314
        $region52: #{tpu_custom_call.1} parent=47 // pred_fallthru
          _
        // Predicated region
        $region53: #{tpu_custom_call.1} parent=47 // pred_check
          %p316 = pneg %p65
        $region54: #{tpu_custom_call.1} parent=47 // pred_check_branch
          %318 = sbr.rel (%p316) target = $region56
        $region55: #{tpu_custom_call.1} parent=47 // pred_region
          %p319 = scmp.lt.s32.totalorder %s19, 1
          %s320 = scalar_select %p319, %s19, 1
          %s321 = smul.addr %s320, 2
          %s322 = smul.addr %s321, 8
          %s323 = scalar_lea.vmem %s1, %s322
        $region56: #{tpu_custom_call.1} parent=47 // pred_fallthru
          _
      $region48: #{tpu_custom_call.1} parent=5 // pred_fallthru
        _
      %p324 = scmp.le.s32.totalorder 1, %s19
      %p325 = scmp.lt.s32.totalorder %s19, 3
      %p326 = pnand %p324, %p325
      %p327 = pneg %p326
      // Predicated region
      $region57: #{tpu_custom_call.1} parent=5 // pred_check
        _
      $region58: #{tpu_custom_call.1} parent=5 // pred_check_branch
        %329 = sbr.rel (%p326) target = $region60
      $region59: #{tpu_custom_call.1} parent=5 // pred_region
        %s330 = ssub.s32 %s19, 1
        %p331 = scmp.lt.s32.totalorder %s24, 1
        %s332 = scalar_select %p331, %s24, 1
        %s333 = smul.addr %s332, 2
        %s334 = smul.addr %s333, 8
        %s335 = scalar_lea.vmem %s0, %s334
        %p336 = pneg %p45
        %p337 = pneg %p42
        %p338 = scmp.lt.s32.totalorder %s24, 1
        %s339 = scalar_select %p338, %s24, 1
        %s340 = smul.addr %s339, 2
        %s341 = smul.addr %s340, 8
        %s342 = scalar_lea.vmem %s1, %s341
        %p343 = pneg %p71
        %p344 = pneg %p68
        %p345 = pneg %p92
        %p346 = pneg %p89
        %p347 = pneg %p113
        %p348 = pneg %p110
        %p349 = pneg %p134
        %p350 = pneg %p131
        %p351 = pneg %p155
        %p352 = pneg %p152
        %p353 = pneg %p176
        %p354 = pneg %p173
        %p355 = pneg %p197
        %p356 = pneg %p194
        %p357 = pneg %p218
        %p358 = pneg %p215
        %p359 = pneg %p239
        %p360 = pneg %p236
        %p361 = pneg %p265
        %p362 = pneg %p262
        %s363 = sand.u32 %s252, 1
        %s364 = scalar_lea.sflag [#allocation3], %s363
        %s365 = sand.u32 %s252, 1
        %s366 = smul.addr %s365, 4
        %s367 = scalar_lea.vmem [#allocation2], %s366
        %p368 = scmp.lt.s32.totalorder %s24, 1
        %s369 = scalar_select %p368, %s24, 1
        %s370 = smul.addr %s369, 2
        %s371 = smul.addr %s370, 8
        %s372 = scalar_lea.vmem %s0, %s371
        %p373 = scmp.lt.s32.totalorder %s24, 1
        %s374 = scalar_select %p373, %s24, 1
        %s375 = smul.addr %s374, 2
        %s376 = smul.addr %s375, 8
        %s377 = scalar_lea.vmem %s1, %s376
        %v379 = vld [vmem:[%s372] sm:$0xff]
        %v380 = vld [vmem:[%s372 + $0x8] sm:$0xff]
        %v381 = vld [vmem:[%s377] sm:$0xff]
        %v382 = vld [vmem:[%s377 + $0x8] sm:$0xff]
        %v383 = vld [vmem:[%s2] sm:$0xff]
        %v384 = vld [vmem:[%s2 + $0x8] sm:$0xff]
        %v385 = vld [vmem:[%s3] sm:$0xff]
        %v386 = vld [vmem:[%s3 + $0x8] sm:$0xff]
        %v387 = vld [vmem:[%s3 + $0x10] sm:$0xff]
        %v388 = vld [vmem:[%s3 + $0x18] sm:$0xff]
        %v389 = vld [vmem:[%s7] sm:$0xff]
        %v390 = vld [vmem:[%s7 + $0x8] sm:$0xff]
        %v391 = vld [vmem:[%s8] sm:$0xff]
        %v392 = vld [vmem:[%s8 + $0x8] sm:$0xff]
        %v393 = vld [vmem:[%s9] sm:$0xff]
        %v394 = vld [vmem:[%s9 + $0x8] sm:$0xff]
        %397 = vrot.lane.b32.xlu0 %v381, 4
        %v398 = vpop.permute.xlu0 %397
        %399 = vrot.lane.b32.xlu0 %v382, 4
        %v400 = vpop.permute.xlu0 %399
        %vm403 = vcmask 31744
        %v404 = vsel %vm403, %v379, %v398
        %v405 = vsel %vm403, %v380, %v400
        %vm406 = vcmask 130048
        %v408 = vsel %vm406, %v385, 0
        %v411 = vsel %vm406, %v386, 0
        %413 = vmatprep.subr.mxu0 0.0
        %414 = vmatpush1.msra.mxu0 %v404
        %415 = vmatprep.subr.mxu0 0.0
        %416 = vmatpush1.msra.mxu0 %v405
        %417 = vmatprep.subr.mxu0 0.0
        %418 = vmatpush1.msra.mxu0 0.0
        %419 = vmatprep.subr.mxu0 0.0
        %420 = vmatpush1.msra.mxu0 0.0
        %421 = vmatprep.subr.mxu0 0.0
        %422 = vmatpush1.msra.mxu0 0.0
        %423 = vmatprep.subr.mxu0 0.0
        %424 = vmatpush1.msra.mxu0 0.0
        %425 = vmatprep.subr.mxu0 0.0
        %426 = vmatpush1.msra.mxu0 0.0
        %427 = vmatprep.subr.mxu0 0.0
        %428 = vmatpush1.msra.mxu0 0.0
        %429 = vmatprep.subr.mxu0 0.0
        %430 = vmatpush1.msra.mxu0 0.0
        %431 = vmatprep.subr.mxu0 0.0
        %432 = vmatpush1.msra.mxu0 0.0
        %433 = vmatprep.subr.mxu0 0.0
        %434 = vmatpush1.msra.mxu0 0.0
        %435 = vmatprep.subr.mxu0 0.0
        %436 = vmatpush1.msra.mxu0 0.0
        %437 = vmatprep.subr.mxu0 0.0
        %438 = vmatpush1.msra.mxu0 0.0
        %439 = vmatprep.subr.mxu0 0.0
        %440 = vmatpush1.msra.mxu0 0.0
        %441 = vmatprep.subr.mxu0 0.0
        %442 = vmatpush1.msra.mxu0 0.0
        %443 = vmatprep.subr.mxu0 0.0
        %444 = vmatpush1.msra.mxu0 0.0
        %445 = vmatprep.subr.mxu0 0.0
        %446 = vmatpush1.msra.mxu0 0.0
        %447 = vmatprep.subr.mxu0 0.0
        %448 = vmatpush1.msra.mxu0 0.0
        %449 = vmatprep.subr.mxu0 0.0
        %450 = vmatpush1.msra.mxu0 0.0
        %451 = vmatprep.subr.mxu0 0.0
        %452 = vmatpush1.msra.mxu0 0.0
        %453 = vmatprep.subr.mxu0 0.0
        %454 = vmatpush1.msra.mxu0 0.0
        %455 = vmatprep.subr.mxu0 0.0
        %456 = vmatpush1.msra.mxu0 0.0
        %457 = vmatprep.subr.mxu0 0.0
        %458 = vmatpush1.msra.mxu0 0.0
        %459 = vmatprep.subr.mxu0 0.0
        %460 = vmatpush1.msra.mxu0 0.0
        %461 = vmatprep.subr.mxu0 0.0
        %462 = vmatpush1.msra.mxu0 0.0
        %463 = vmatprep.subr.mxu0 0.0
        %464 = vmatpush1.msra.mxu0 0.0
        %465 = vmatprep.subr.mxu0 0.0
        %466 = vmatpush1.msra.mxu0 0.0
        %467 = vmatprep.subr.mxu0 0.0
        %468 = vmatpush1.msra.mxu0 0.0
        %469 = vmatprep.subr.mxu0 0.0
        %470 = vmatpush1.msra.mxu0 0.0
        %471 = vmatprep.subr.mxu0 0.0
        %472 = vmatpush1.msra.mxu0 0.0
        %473 = vmatprep.subr.mxu0 0.0
        %474 = vmatpush1.msra.mxu0 0.0
        %475 = vmatprep.subr.mxu0 0.0
        %476 = vmatpush1.msra.mxu0 0.0
        %477 = vmatprep.mubr.f32.mxu0 0.0
        %478 = vmatmul.mubr.f32.gmra.mrb[0].mxu0 %v408
        %v479 = vpop.f32.mrb[0].mxu0
        %v480 = vadd.f32 0.0, %v479
        %v481 = vpop.f32.mrb[0].mxu0
        %482 = vmatprep.mubr.f32.mxu0 0.0
        %483 = vmatmul.mubr.f32.gmra.mrb[0].mxu0 %v411
        %v484 = vpop.f32.mrb[0].mxu0
        %v485 = vadd.f32 0.0, %v484
        %v486 = vpop.f32.mrb[0].mxu0
        %487 = vdwg.mxu0
        %v489 = vsel %vm406, %v387, 0
        %v492 = vsel %vm406, %v388, 0
        %494 = vmatprep.subr.mxu0 0.0
        %495 = vmatpush1.msra.mxu0 %v404
        %496 = vmatprep.subr.mxu0 0.0
        %497 = vmatpush1.msra.mxu0 %v405
        %498 = vmatprep.subr.mxu0 0.0
        %499 = vmatpush1.msra.mxu0 0.0
        %500 = vmatprep.subr.mxu0 0.0
        %501 = vmatpush1.msra.mxu0 0.0
        %502 = vmatprep.subr.mxu0 0.0
        %503 = vmatpush1.msra.mxu0 0.0
        %504 = vmatprep.subr.mxu0 0.0
        %505 = vmatpush1.msra.mxu0 0.0
        %506 = vmatprep.subr.mxu0 0.0
        %507 = vmatpush1.msra.mxu0 0.0
        %508 = vmatprep.subr.mxu0 0.0
        %509 = vmatpush1.msra.mxu0 0.0
        %510 = vmatprep.subr.mxu0 0.0
        %511 = vmatpush1.msra.mxu0 0.0
        %512 = vmatprep.subr.mxu0 0.0
        %513 = vmatpush1.msra.mxu0 0.0
        %514 = vmatprep.subr.mxu0 0.0
        %515 = vmatpush1.msra.mxu0 0.0
        %516 = vmatprep.subr.mxu0 0.0
        %517 = vmatpush1.msra.mxu0 0.0
        %518 = vmatprep.subr.mxu0 0.0
        %519 = vmatpush1.msra.mxu0 0.0
        %520 = vmatprep.subr.mxu0 0.0
        %521 = vmatpush1.msra.mxu0 0.0
        %522 = vmatprep.subr.mxu0 0.0
        %523 = vmatpush1.msra.mxu0 0.0
        %524 = vmatprep.subr.mxu0 0.0
        %525 = vmatpush1.msra.mxu0 0.0
        %526 = vmatprep.subr.mxu0 0.0
        %527 = vmatpush1.msra.mxu0 0.0
        %528 = vmatprep.subr.mxu0 0.0
        %529 = vmatpush1.msra.mxu0 0.0
        %530 = vmatprep.subr.mxu0 0.0
        %531 = vmatpush1.msra.mxu0 0.0
        %532 = vmatprep.subr.mxu0 0.0
        %533 = vmatpush1.msra.mxu0 0.0
        %534 = vmatprep.subr.mxu0 0.0
        %535 = vmatpush1.msra.mxu0 0.0
        %536 = vmatprep.subr.mxu0 0.0
        %537 = vmatpush1.msra.mxu0 0.0
        %538 = vmatprep.subr.mxu0 0.0
        %539 = vmatpush1.msra.mxu0 0.0
        %540 = vmatprep.subr.mxu0 0.0
        %541 = vmatpush1.msra.mxu0 0.0
        %542 = vmatprep.subr.mxu0 0.0
        %543 = vmatpush1.msra.mxu0 0.0
        %544 = vmatprep.subr.mxu0 0.0
        %545 = vmatpush1.msra.mxu0 0.0
        %546 = vmatprep.subr.mxu0 0.0
        %547 = vmatpush1.msra.mxu0 0.0
        %548 = vmatprep.subr.mxu0 0.0
        %549 = vmatpush1.msra.mxu0 0.0
        %550 = vmatprep.subr.mxu0 0.0
        %551 = vmatpush1.msra.mxu0 0.0
        %552 = vmatprep.subr.mxu0 0.0
        %553 = vmatpush1.msra.mxu0 0.0
        %554 = vmatprep.subr.mxu0 0.0
        %555 = vmatpush1.msra.mxu0 0.0
        %556 = vmatprep.subr.mxu0 0.0
        %557 = vmatpush1.msra.mxu0 0.0
        %558 = vmatprep.mubr.f32.mxu0 0.0
        %559 = vmatmul.mubr.f32.gmra.mrb[0].mxu0 %v489
        %v560 = vpop.f32.mrb[0].mxu0
        %v561 = vadd.f32 0.0, %v560
        %v562 = vpop.f32.mrb[0].mxu0
        %563 = vmatprep.mubr.f32.mxu0 0.0
        %564 = vmatmul.mubr.f32.gmra.mrb[0].mxu0 %v492
        %v565 = vpop.f32.mrb[0].mxu0
        %v566 = vadd.f32 0.0, %v565
        %v567 = vpop.f32.mrb[0].mxu0
        %568 = vdwg.mxu0
        %571 = vrot.lane.b32.xlu0 %v480, 36
        %v572 = vpop.permute.xlu0 %571
        %573 = vrot.lane.b32.xlu0 %v485, 36
        %v574 = vpop.permute.xlu0 %573
        %579 = vrot.lane.b32.xlu0 %v561, 72
        %v580 = vpop.permute.xlu0 %579
        %581 = vrot.lane.b32.xlu0 %v566, 72
        %v582 = vpop.permute.xlu0 %581
        %vm585 = vcmask 293888
        %v586 = vsel %vm585, %v404, %v572
        %v587 = vsel %vm585, %v405, %v574
        %vm588 = vcmask 588800
        %v589 = vsel %vm588, %v586, %v580
        %v590 = vsel %vm588, %v587, %v582
        %592 = vset.pattern.permute.xlu0 0
        %593 = vperm.xlu0 %592, %v383
        %v594 = vpop.permute.xlu0 %593
        %597 = vset.pattern.permute.xlu0 0
        %598 = vperm.xlu0 %597, %v384
        %v599 = vpop.permute.xlu0 %598
        %v601 = vmul.f32 %v594, %v589
        %v602 = vmul.f32 %v599, %v590
        %603 = vset.pattern.permute.xlu0 1
        %604 = vperm.xlu0 %603, %v383
        %v605 = vpop.permute.xlu0 %604
        %607 = vset.pattern.permute.xlu0 1
        %608 = vperm.xlu0 %607, %v384
        %v609 = vpop.permute.xlu0 %608
        %v611 = vmul.f32 %v605, %v589
        %v612 = vmul.f32 %v609, %v590
        %613 = vset.pattern.permute.xlu0 2
        %614 = vperm.xlu0 %613, %v383
        %v615 = vpop.permute.xlu0 %614
        %617 = vset.pattern.permute.xlu0 2
        %618 = vperm.xlu0 %617, %v384
        %v619 = vpop.permute.xlu0 %618
        %v621 = vmul.f32 %v615, %v589
        %v622 = vmul.f32 %v619, %v590
        %623 = vset.pattern.permute.xlu0 3
        %624 = vperm.xlu0 %623, %v383
        %v625 = vpop.permute.xlu0 %624
        %627 = vset.pattern.permute.xlu0 3
        %628 = vperm.xlu0 %627, %v384
        %v629 = vpop.permute.xlu0 %628
        %v631 = vmul.f32 %v625, %v589
        %v632 = vmul.f32 %v629, %v590
        %633 = vset.pattern.permute.xlu0 4
        %634 = vperm.xlu0 %633, %v383
        %v635 = vpop.permute.xlu0 %634
        %637 = vset.pattern.permute.xlu0 4
        %638 = vperm.xlu0 %637, %v384
        %v639 = vpop.permute.xlu0 %638
        %v641 = vmul.f32 %v635, %v589
        %v642 = vmul.f32 %v639, %v590
        %643 = vset.pattern.permute.xlu0 5
        %644 = vperm.xlu0 %643, %v383
        %v645 = vpop.permute.xlu0 %644
        %647 = vset.pattern.permute.xlu0 5
        %648 = vperm.xlu0 %647, %v384
        %v649 = vpop.permute.xlu0 %648
        %v651 = vmul.f32 %v645, %v589
        %v652 = vmul.f32 %v649, %v590
        %653 = vset.pattern.permute.xlu0 6
        %654 = vperm.xlu0 %653, %v383
        %v655 = vpop.permute.xlu0 %654
        %657 = vset.pattern.permute.xlu0 6
        %658 = vperm.xlu0 %657, %v384
        %v659 = vpop.permute.xlu0 %658
        %v661 = vmul.f32 %v655, %v589
        %v662 = vmul.f32 %v659, %v590
        %663 = vset.pattern.permute.xlu0 7
        %664 = vperm.xlu0 %663, %v383
        %v665 = vpop.permute.xlu0 %664
        %667 = vset.pattern.permute.xlu0 7
        %668 = vperm.xlu0 %667, %v384
        %v669 = vpop.permute.xlu0 %668
        %v671 = vmul.f32 %v665, %v589
        %v672 = vmul.f32 %v669, %v590
        %675 = vrot.lane.b32.xlu0 %v611, 108
        %v676 = vpop.permute.xlu0 %675
        %677 = vrot.lane.b32.xlu0 %v612, 108
        %v678 = vpop.permute.xlu0 %677
        %683 = vrot.lane.b32.xlu0 %v621, 88
        %v684 = vpop.permute.xlu0 %683
        %685 = vrot.lane.b32.xlu0 %v622, 88
        %v686 = vpop.permute.xlu0 %685
        %691 = vrot.lane.b32.xlu0 %v631, 68
        %v692 = vpop.permute.xlu0 %691
        %693 = vrot.lane.b32.xlu0 %v632, 68
        %v694 = vpop.permute.xlu0 %693
        %699 = vrot.lane.b32.xlu0 %v641, 48
        %v700 = vpop.permute.xlu0 %699
        %701 = vrot.lane.b32.xlu0 %v642, 48
        %v702 = vpop.permute.xlu0 %701
        %707 = vrot.lane.b32.xlu0 %v651, 28
        %v708 = vpop.permute.xlu0 %707
        %709 = vrot.lane.b32.xlu0 %v652, 28
        %v710 = vpop.permute.xlu0 %709
        %715 = vrot.lane.b32.xlu0 %v661, 8
        %v716 = vpop.permute.xlu0 %715
        %717 = vrot.lane.b32.xlu0 %v662, 8
        %v718 = vpop.permute.xlu0 %717
        %723 = vrot.lane.b32.xlu0 %v671, 116
        %v724 = vpop.permute.xlu0 %723
        %725 = vrot.lane.b32.xlu0 %v672, 116
        %v726 = vpop.permute.xlu0 %725
        %vm729 = vcmask 883712
        %v730 = vsel %vm729, %v601, %v676
        %v731 = vsel %vm729, %v602, %v678
        %vm732 = vcmask 719872
        %v733 = vsel %vm732, %v676, %v684
        %v734 = vsel %vm732, %v678, %v686
        %vm735 = vcmask 556032
        %v736 = vsel %vm735, %v684, %v692
        %v737 = vsel %vm735, %v686, %v694
        %vm738 = vcmask 392192
        %v739 = vsel %vm738, %v692, %v700
        %v740 = vsel %vm738, %v694, %v702
        %vm741 = vcmask 228352
        %v742 = vsel %vm741, %v700, %v708
        %v743 = vsel %vm741, %v702, %v710
        %vm744 = vcmask 64512
        %v745 = vsel %vm744, %v708, %v716
        %v746 = vsel %vm744, %v710, %v718
        %vm747 = vcmask 949248
        %v748 = vsel %vm747, %v745, %v724
        %v749 = vsel %vm747, %v746, %v726
        %v750 = vpack.c.bf16 %v731, %v730
        %v751 = vpack.c.bf16 %v734, %v733
        %v752 = vpack.c.bf16 %v737, %v736
        %v753 = vpack.c.bf16 %v740, %v739
        %v754 = vpack.c.bf16 %v743, %v742
        %v755 = vpack.c.bf16 %v749, %v748
        %v756 = vpack.c.bf16 %v726, %v724
        %v757 = vld [vmem:[%s4] sm:$0xf]
        %v758 = vld [vmem:[%s4 + $0x4] sm:$0xf]
        %v759 = vld [vmem:[%s4 + $0x8] sm:$0xf]
        %v760 = vld [vmem:[%s4 + $0xc] sm:$0xf]
        %v761 = vld [vmem:[%s4 + $0x10] sm:$0xf]
        %v762 = vld [vmem:[%s4 + $0x14] sm:$0xf]
        %v763 = vld [vmem:[%s4 + $0x18] sm:$0xf]
        %v764 = vld [vmem:[%s4 + $0x1c] sm:$0xf]
        %v765 = vld [vmem:[%s4 + $0x20] sm:$0xf]
        %v766 = vld [vmem:[%s4 + $0x24] sm:$0xf]
        %v767 = vld [vmem:[%s4 + $0x28] sm:$0xf]
        %v768 = vld [vmem:[%s4 + $0x2c] sm:$0xf]
        %v769 = vld [vmem:[%s4 + $0x30] sm:$0xf]
        %v770 = vld [vmem:[%s4 + $0x34] sm:$0xf]
        %v771 = vld [vmem:[%s4 + $0x38] sm:$0xf]
        %v772 = vld [vmem:[%s4 + $0x3c] sm:$0xf]
        %v773 = vld [vmem:[%s4 + $0x40] sm:$0xf]
        %v774 = vld [vmem:[%s4 + $0x44] sm:$0xf]
        %v775 = vld [vmem:[%s4 + $0x48] sm:$0xf]
        %v776 = vld [vmem:[%s4 + $0x4c] sm:$0xf]
        %v777 = vld [vmem:[%s4 + $0x50] sm:$0xf]
        %v778 = vld [vmem:[%s4 + $0x54] sm:$0xf]
        %v779 = vld [vmem:[%s4 + $0x58] sm:$0xf]
        %v780 = vld [vmem:[%s4 + $0x5c] sm:$0xf]
        %v781 = vld [vmem:[%s4 + $0x60] sm:$0xf]
        %v782 = vld [vmem:[%s4 + $0x64] sm:$0xf]
        %v783 = vld [vmem:[%s4 + $0x68] sm:$0xf]
        %v784 = vld [vmem:[%s4 + $0x6c] sm:$0xf]
        %v785 = vld [vmem:[%s4 + $0x70] sm:$0xf]
        %v786 = vld [vmem:[%s4 + $0x74] sm:$0xf]
        %v787 = vld [vmem:[%s4 + $0x78] sm:$0xf]
        %v788 = vld [vmem:[%s4 + $0x7c] sm:$0xf]
        %v789 = vld [vmem:[%s4 + $0x80] sm:$0xf]
        %v790 = vld [vmem:[%s4 + $0x84] sm:$0xf]
        %v791 = vld [vmem:[%s4 + $0x88] sm:$0xf]
        %v792 = vld [vmem:[%s4 + $0x8c] sm:$0xf]
        %v793 = vld [vmem:[%s4 + $0x90] sm:$0xf]
        %v794 = vld [vmem:[%s4 + $0x94] sm:$0xf]
        %v795 = vld [vmem:[%s4 + $0x98] sm:$0xf]
        %v796 = vld [vmem:[%s4 + $0x9c] sm:$0xf]
        %v797 = vld [vmem:[%s4 + $0xa0] sm:$0xf]
        %v798 = vld [vmem:[%s4 + $0xa4] sm:$0xf]
        %v799 = vld [vmem:[%s4 + $0xa8] sm:$0xf]
        %v800 = vld [vmem:[%s4 + $0xac] sm:$0xf]
        %v801 = vld [vmem:[%s4 + $0xb0] sm:$0xf]
        %v802 = vld [vmem:[%s4 + $0xb4] sm:$0xf]
        %v803 = vld [vmem:[%s4 + $0xb8] sm:$0xf]
        %v804 = vld [vmem:[%s4 + $0xbc] sm:$0xf]
        %v805 = vld [vmem:[%s4 + $0xc0] sm:$0xf]
        %v806 = vld [vmem:[%s4 + $0xc4] sm:$0xf]
        %v807 = vld [vmem:[%s4 + $0xc8] sm:$0xf]
        %v808 = vld [vmem:[%s4 + $0xcc] sm:$0xf]
        %v809 = vld [vmem:[%s4 + $0xd0] sm:$0xf]
        %v810 = vld [vmem:[%s4 + $0xd4] sm:$0xf]
        %v811 = vld [vmem:[%s4 + $0xd8] sm:$0xf]
        %v812 = vld [vmem:[%s4 + $0xdc] sm:$0xf]
        %v813 = vld [vmem:[%s4 + $0xe0] sm:$0xf]
        %v814 = vld [vmem:[%s4 + $0xe4] sm:$0xf]
        %v815 = vld [vmem:[%s4 + $0xe8] sm:$0xf]
        %v816 = vld [vmem:[%s4 + $0xec] sm:$0xf]
        %v817 = vld [vmem:[%s4 + $0xf0] sm:$0xf]
        %v818 = vld [vmem:[%s4 + $0xf4] sm:$0xf]
        %v819 = vld [vmem:[%s4 + $0xf8] sm:$0xf]
        %v820 = vld [vmem:[%s4 + $0xfc] sm:$0xf]
        %v821 = vld [vmem:[%s4 + $0x100] sm:$0xf]
        %v822 = vld [vmem:[%s4 + $0x104] sm:$0xf]
        %v823 = vld [vmem:[%s4 + $0x108] sm:$0xf]
        %v824 = vld [vmem:[%s4 + $0x10c] sm:$0xf]
        %v825 = vld [vmem:[%s4 + $0x110] sm:$0xf]
        %v826 = vld [vmem:[%s4 + $0x114] sm:$0xf]
        %v827 = vld [vmem:[%s4 + $0x118] sm:$0xf]
        %v828 = vld [vmem:[%s4 + $0x11c] sm:$0xf]
        %v829 = vld [vmem:[%s4 + $0x120] sm:$0xf]
        %v830 = vld [vmem:[%s4 + $0x124] sm:$0xf]
        %v831 = vld [vmem:[%s4 + $0x128] sm:$0xf]
        %v832 = vld [vmem:[%s4 + $0x12c] sm:$0xf]
        %v833 = vld [vmem:[%s4 + $0x130] sm:$0xf]
        %v834 = vld [vmem:[%s4 + $0x134] sm:$0xf]
        %v835 = vld [vmem:[%s4 + $0x138] sm:$0xf]
        %v836 = vld [vmem:[%s4 + $0x13c] sm:$0xf]
        %v837 = vld [vmem:[%s4 + $0x140] sm:$0xf]
        %v838 = vld [vmem:[%s4 + $0x144] sm:$0xf]
        %v839 = vld [vmem:[%s4 + $0x148] sm:$0xf]
        %v840 = vld [vmem:[%s4 + $0x14c] sm:$0xf]
        %v841 = vld [vmem:[%s4 + $0x150] sm:$0xf]
        %v842 = vld [vmem:[%s4 + $0x154] sm:$0xf]
        %v843 = vld [vmem:[%s4 + $0x158] sm:$0xf]
        %v844 = vld [vmem:[%s4 + $0x15c] sm:$0xf]
        %v845 = vld [vmem:[%s4 + $0x160] sm:$0xf]
        %v846 = vld [vmem:[%s4 + $0x164] sm:$0xf]
        %v847 = vld [vmem:[%s4 + $0x168] sm:$0xf]
        %v848 = vld [vmem:[%s4 + $0x16c] sm:$0xf]
        %v849 = vld [vmem:[%s4 + $0x170] sm:$0xf]
        %v850 = vld [vmem:[%s4 + $0x174] sm:$0xf]
        %v851 = vld [vmem:[%s4 + $0x178] sm:$0xf]
        %v852 = vld [vmem:[%s4 + $0x17c] sm:$0xf]
        %v853 = vld [vmem:[%s4 + $0x180] sm:$0xf]
        %v854 = vld [vmem:[%s4 + $0x184] sm:$0xf]
        %v855 = vld [vmem:[%s4 + $0x188] sm:$0xf]
        %v856 = vld [vmem:[%s4 + $0x18c] sm:$0xf]
        %v857 = vld [vmem:[%s4 + $0x190] sm:$0xf]
        %v858 = vld [vmem:[%s4 + $0x194] sm:$0xf]
        %v859 = vld [vmem:[%s4 + $0x198] sm:$0xf]
        %v860 = vld [vmem:[%s4 + $0x19c] sm:$0xf]
        %v861 = vld [vmem:[%s4 + $0x1a0] sm:$0xf]
        %v862 = vld [vmem:[%s4 + $0x1a4] sm:$0xf]
        %v863 = vld [vmem:[%s4 + $0x1a8] sm:$0xf]
        %v864 = vld [vmem:[%s4 + $0x1ac] sm:$0xf]
        %v973 = vunpack.c.l.b16 %v757
        %v974 = vunpack.c.l.b16 %v758
        %v975 = vunpack.c.l.b16 %v759
        %v976 = vunpack.c.l.b16 %v760
        %v977 = vunpack.c.l.b16 %v761
        %v978 = vunpack.c.l.b16 %v762
        %v979 = vunpack.c.l.b16 %v763
        %v980 = vunpack.c.l.b16 %v764
        %v981 = vunpack.c.l.b16 %v765
        %v982 = vunpack.c.l.b16 %v766
        %v983 = vunpack.c.l.b16 %v767
        %v984 = vunpack.c.l.b16 %v768
        %v985 = vunpack.c.l.b16 %v769
        %v986 = vunpack.c.l.b16 %v770
        %v987 = vunpack.c.l.b16 %v771
        %v988 = vunpack.c.l.b16 %v772
        %v989 = vunpack.c.l.b16 %v773
        %v990 = vunpack.c.l.b16 %v774
        %v991 = vunpack.c.l.b16 %v775
        %v992 = vunpack.c.l.b16 %v776
        %v993 = vunpack.c.l.b16 %v777
        %v994 = vunpack.c.l.b16 %v778
        %v995 = vunpack.c.l.b16 %v779
        %v996 = vunpack.c.l.b16 %v780
        %v997 = vunpack.c.l.b16 %v781
        %v998 = vunpack.c.l.b16 %v782
        %v999 = vunpack.c.l.b16 %v783
        %v1000 = vunpack.c.l.b16 %v784
        %v1001 = vunpack.c.l.b16 %v785
        %v1002 = vunpack.c.l.b16 %v786
        %v1003 = vunpack.c.l.b16 %v787
        %v1004 = vunpack.c.l.b16 %v788
        %v1005 = vunpack.c.l.b16 %v789
        %v1006 = vunpack.c.l.b16 %v790
        %v1007 = vunpack.c.l.b16 %v791
        %v1008 = vunpack.c.l.b16 %v792
        %v1009 = vunpack.c.l.b16 %v793
        %v1010 = vunpack.c.l.b16 %v794
        %v1011 = vunpack.c.l.b16 %v795
        %v1012 = vunpack.c.l.b16 %v796
        %v1013 = vunpack.c.l.b16 %v797
        %v1014 = vunpack.c.l.b16 %v798
        %v1015 = vunpack.c.l.b16 %v799
        %v1016 = vunpack.c.l.b16 %v800
        %v1017 = vunpack.c.l.b16 %v801
        %v1018 = vunpack.c.l.b16 %v802
        %v1019 = vunpack.c.l.b16 %v803
        %v1020 = vunpack.c.l.b16 %v804
        %v1021 = vunpack.c.l.b16 %v805
        %v1022 = vunpack.c.l.b16 %v806
        %v1023 = vunpack.c.l.b16 %v807
        %v1024 = vunpack.c.l.b16 %v808
        %v1025 = vunpack.c.l.b16 %v809
        %v1026 = vunpack.c.l.b16 %v810
        %v1027 = vunpack.c.l.b16 %v811
        %v1028 = vunpack.c.l.b16 %v812
        %v1029 = vunpack.c.l.b16 %v813
        %v1030 = vunpack.c.l.b16 %v814
        %v1031 = vunpack.c.l.b16 %v815
        %v1032 = vunpack.c.l.b16 %v816
        %v1033 = vunpack.c.l.b16 %v817
        %v1034 = vunpack.c.l.b16 %v818
        %v1035 = vunpack.c.l.b16 %v819
        %v1036 = vunpack.c.l.b16 %v820
        %v1037 = vunpack.c.l.b16 %v821
        %v1038 = vunpack.c.l.b16 %v822
        %v1039 = vunpack.c.l.b16 %v823
        %v1040 = vunpack.c.l.b16 %v824
        %v1041 = vunpack.c.l.b16 %v825
        %v1042 = vunpack.c.l.b16 %v826
        %v1043 = vunpack.c.l.b16 %v827
        %v1044 = vunpack.c.l.b16 %v828
        %v1045 = vunpack.c.l.b16 %v829
        %v1046 = vunpack.c.l.b16 %v830
        %v1047 = vunpack.c.l.b16 %v831
        %v1048 = vunpack.c.l.b16 %v832
        %v1049 = vunpack.c.l.b16 %v833
        %v1050 = vunpack.c.l.b16 %v834
        %v1051 = vunpack.c.l.b16 %v835
        %v1052 = vunpack.c.l.b16 %v836
        %v1053 = vunpack.c.l.b16 %v837
        %v1054 = vunpack.c.l.b16 %v838
        %v1055 = vunpack.c.l.b16 %v839
        %v1056 = vunpack.c.l.b16 %v840
        %v1057 = vunpack.c.l.b16 %v841
        %v1058 = vunpack.c.l.b16 %v842
        %v1059 = vunpack.c.l.b16 %v843
        %v1060 = vunpack.c.l.b16 %v844
        %v1061 = vunpack.c.l.b16 %v845
        %v1062 = vunpack.c.l.b16 %v846
        %v1063 = vunpack.c.l.b16 %v847
        %v1064 = vunpack.c.l.b16 %v848
        %v1065 = vunpack.c.l.b16 %v849
        %v1066 = vunpack.c.l.b16 %v850
        %v1067 = vunpack.c.l.b16 %v851
        %v1068 = vunpack.c.l.b16 %v852
        %v1069 = vunpack.c.l.b16 %v853
        %v1070 = vunpack.c.l.b16 %v854
        %v1071 = vunpack.c.l.b16 %v855
        %v1072 = vunpack.c.l.b16 %v856
        %v1073 = vunpack.c.l.b16 %v857
        %v1074 = vunpack.c.l.b16 %v858
        %v1075 = vunpack.c.l.b16 %v859
        %v1076 = vunpack.c.l.b16 %v860
        %v1077 = vunpack.c.l.b16 %v861
        %v1078 = vunpack.c.l.b16 %v862
        %v1079 = vunpack.c.l.b16 %v863
        %v1080 = vunpack.c.l.b16 %v864
        %v1081 = vpack.c.b16 %v974, %v973
        %v1082 = vpack.c.b16 %v976, %v975
        %v1083 = vpack.c.b16 %v978, %v977
        %v1084 = vpack.c.b16 %v980, %v979
        %v1085 = vpack.c.b16 %v982, %v981
        %v1086 = vpack.c.b16 %v984, %v983
        %v1087 = vpack.c.b16 %v986, %v985
        %v1088 = vpack.c.b16 %v988, %v987
        %v1089 = vpack.c.b16 %v990, %v989
        %v1090 = vpack.c.b16 %v992, %v991
        %v1091 = vpack.c.b16 %v994, %v993
        %v1092 = vpack.c.b16 %v996, %v995
        %v1093 = vpack.c.b16 %v998, %v997
        %v1094 = vpack.c.b16 %v1000, %v999
        %v1095 = vpack.c.b16 %v1002, %v1001
        %v1096 = vpack.c.b16 %v1004, %v1003
        %v1097 = vpack.c.b16 %v1006, %v1005
        %v1098 = vpack.c.b16 %v1008, %v1007
        %v1099 = vpack.c.b16 %v1010, %v1009
        %v1100 = vpack.c.b16 %v1012, %v1011
        %v1101 = vpack.c.b16 %v1014, %v1013
        %v1102 = vpack.c.b16 %v1016, %v1015
        %v1103 = vpack.c.b16 %v1018, %v1017
        %v1104 = vpack.c.b16 %v1020, %v1019
        %v1105 = vpack.c.b16 %v1022, %v1021
        %v1106 = vpack.c.b16 %v1024, %v1023
        %v1107 = vpack.c.b16 %v1026, %v1025
        %v1108 = vpack.c.b16 %v1028, %v1027
        %v1109 = vpack.c.b16 %v1030, %v1029
        %v1110 = vpack.c.b16 %v1032, %v1031
        %v1111 = vpack.c.b16 %v1034, %v1033
        %v1112 = vpack.c.b16 %v1036, %v1035
        %v1113 = vpack.c.b16 %v1038, %v1037
        %v1114 = vpack.c.b16 %v1040, %v1039
        %v1115 = vpack.c.b16 %v1042, %v1041
        %v1116 = vpack.c.b16 %v1044, %v1043
        %v1117 = vpack.c.b16 %v1046, %v1045
        %v1118 = vpack.c.b16 %v1048, %v1047
        %v1119 = vpack.c.b16 %v1050, %v1049
        %v1120 = vpack.c.b16 %v1052, %v1051
        %v1121 = vpack.c.b16 %v1054, %v1053
        %v1122 = vpack.c.b16 %v1056, %v1055
        %v1123 = vpack.c.b16 %v1058, %v1057
        %v1124 = vpack.c.b16 %v1060, %v1059
        %v1125 = vpack.c.b16 %v1062, %v1061
        %v1126 = vpack.c.b16 %v1064, %v1063
        %v1127 = vpack.c.b16 %v1066, %v1065
        %v1128 = vpack.c.b16 %v1068, %v1067
        %v1129 = vpack.c.b16 %v1070, %v1069
        %v1130 = vpack.c.b16 %v1072, %v1071
        %v1131 = vpack.c.b16 %v1074, %v1073
        %v1132 = vpack.c.b16 %v1076, %v1075
        %v1133 = vpack.c.b16 %v1078, %v1077
        %v1134 = vpack.c.b16 %v1080, %v1079
        %vm1189 = vcmask 785408
        %v1191 = vsel %vm1189, %v756, 0
        %1193 = vmatprep.subr.bf16.mxu0 0
        %1194 = vmatpush1.bf16.msra.mxu0 %v1081
        %1195 = vmatprep.subr.bf16.mxu0 0
        %1196 = vmatpush1.bf16.msra.mxu0 %v1082
        %1197 = vmatprep.subr.bf16.mxu0 0
        %1198 = vmatpush1.bf16.msra.mxu0 %v1083
        %1199 = vmatprep.subr.bf16.mxu0 0
        %1200 = vmatpush1.bf16.msra.mxu0 %v1084
        %1201 = vmatprep.subr.bf16.mxu0 0
        %1202 = vmatpush1.bf16.msra.mxu0 %v1085
        %1203 = vmatprep.subr.bf16.mxu0 0
        %1204 = vmatpush1.bf16.msra.mxu0 %v1086
        %1205 = vmatprep.subr.bf16.mxu0 0
        %1206 = vmatpush1.bf16.msra.mxu0 %v1087
        %1207 = vmatprep.subr.bf16.mxu0 0
        %1208 = vmatpush1.bf16.msra.mxu0 %v1088
        %1209 = vmatprep.subr.bf16.mxu0 0
        %1210 = vmatpush1.bf16.msra.mxu0 %v1089
        %1211 = vmatprep.subr.bf16.mxu0 0
        %1212 = vmatpush1.bf16.msra.mxu0 %v1090
        %1213 = vmatprep.subr.bf16.mxu0 0
        %1214 = vmatpush1.bf16.msra.mxu0 %v1091
        %1215 = vmatprep.subr.bf16.mxu0 0
        %1216 = vmatpush1.bf16.msra.mxu0 %v1092
        %1217 = vmatprep.subr.bf16.mxu0 0
        %1218 = vmatpush1.bf16.msra.mxu0 %v1093
        %1219 = vmatprep.subr.bf16.mxu0 0
        %1220 = vmatpush1.bf16.msra.mxu0 %v1094
        %1221 = vmatprep.subr.bf16.mxu0 0
        %1222 = vmatpush1.bf16.msra.mxu0 %v1095
        %1223 = vmatprep.subr.bf16.mxu0 0
        %1224 = vmatpush1.bf16.msra.mxu0 %v1096
        %1225 = vmatprep.mubr.bf16.mxu0 %v751
        %1226 = vmatmul.mubr.bf16.gmra.mrb[0].mxu0 %v750
        %v1227 = vpop.f32.mrb[0].mxu0
        %v1228 = vadd.f32 %v389, %v1227
        %v1229 = vpop.f32.mrb[0].mxu0
        %v1230 = vpop.f32.mrb[0].mxu0
        %v1231 = vadd.f32 %v390, %v1230
        %v1232 = vpop.f32.mrb[0].mxu0
        %1233 = vdwg.mxu0
        %1234 = vmatprep.subr.bf16.mxu0 0
        %1235 = vmatpush1.bf16.msra.mxu0 %v1097
        %1236 = vmatprep.subr.bf16.mxu0 0
        %1237 = vmatpush1.bf16.msra.mxu0 %v1098
        %1238 = vmatprep.subr.bf16.mxu0 0
        %1239 = vmatpush1.bf16.msra.mxu0 %v1099
        %1240 = vmatprep.subr.bf16.mxu0 0
        %1241 = vmatpush1.bf16.msra.mxu0 %v1100
        %1242 = vmatprep.subr.bf16.mxu0 0
        %1243 = vmatpush1.bf16.msra.mxu0 %v1101
        %1244 = vmatprep.subr.bf16.mxu0 0
        %1245 = vmatpush1.bf16.msra.mxu0 %v1102
        %1246 = vmatprep.subr.bf16.mxu0 0
        %1247 = vmatpush1.bf16.msra.mxu0 %v1103
        %1248 = vmatprep.subr.bf16.mxu0 0
        %1249 = vmatpush1.bf16.msra.mxu0 %v1104
        %1250 = vmatprep.subr.bf16.mxu0 0
        %1251 = vmatpush1.bf16.msra.mxu0 %v1105
        %1252 = vmatprep.subr.bf16.mxu0 0
        %1253 = vmatpush1.bf16.msra.mxu0 %v1106
        %1254 = vmatprep.subr.bf16.mxu0 0
        %1255 = vmatpush1.bf16.msra.mxu0 %v1107
        %1256 = vmatprep.subr.bf16.mxu0 0
        %1257 = vmatpush1.bf16.msra.mxu0 %v1108
        %1258 = vmatprep.subr.bf16.mxu0 0
        %1259 = vmatpush1.bf16.msra.mxu0 %v1109
        %1260 = vmatprep.subr.bf16.mxu0 0
        %1261 = vmatpush1.bf16.msra.mxu0 %v1110
        %1262 = vmatprep.subr.bf16.mxu0 0
        %1263 = vmatpush1.bf16.msra.mxu0 %v1111
        %1264 = vmatprep.subr.bf16.mxu0 0
        %1265 = vmatpush1.bf16.msra.mxu0 %v1112
        %1266 = vmatprep.mubr.bf16.mxu0 %v753
        %1267 = vmatmul.mubr.bf16.gmra.mrb[0].mxu0 %v752
        %v1268 = vpop.f32.mrb[0].mxu0
        %v1269 = vadd.f32 %v1228, %v1268
        %v1270 = vpop.f32.mrb[0].mxu0
        %v1271 = vpop.f32.mrb[0].mxu0
        %v1272 = vadd.f32 %v1231, %v1271
        %v1273 = vpop.f32.mrb[0].mxu0
        %1274 = vdwg.mxu0
        %1275 = vmatprep.subr.bf16.mxu0 0
        %1276 = vmatpush1.bf16.msra.mxu0 %v1113
        %1277 = vmatprep.subr.bf16.mxu0 0
        %1278 = vmatpush1.bf16.msra.mxu0 %v1114
        %1279 = vmatprep.subr.bf16.mxu0 0
        %1280 = vmatpush1.bf16.msra.mxu0 %v1115
        %1281 = vmatprep.subr.bf16.mxu0 0
        %1282 = vmatpush1.bf16.msra.mxu0 %v1116
        %1283 = vmatprep.subr.bf16.mxu0 0
        %1284 = vmatpush1.bf16.msra.mxu0 %v1117
        %1285 = vmatprep.subr.bf16.mxu0 0
        %1286 = vmatpush1.bf16.msra.mxu0 %v1118
        %1287 = vmatprep.subr.bf16.mxu0 0
        %1288 = vmatpush1.bf16.msra.mxu0 %v1119
        %1289 = vmatprep.subr.bf16.mxu0 0
        %1290 = vmatpush1.bf16.msra.mxu0 %v1120
        %1291 = vmatprep.subr.bf16.mxu0 0
        %1292 = vmatpush1.bf16.msra.mxu0 %v1121
        %1293 = vmatprep.subr.bf16.mxu0 0
        %1294 = vmatpush1.bf16.msra.mxu0 %v1122
        %1295 = vmatprep.subr.bf16.mxu0 0
        %1296 = vmatpush1.bf16.msra.mxu0 %v1123
        %1297 = vmatprep.subr.bf16.mxu0 0
        %1298 = vmatpush1.bf16.msra.mxu0 %v1124
        %1299 = vmatprep.subr.bf16.mxu0 0
        %1300 = vmatpush1.bf16.msra.mxu0 %v1125
        %1301 = vmatprep.subr.bf16.mxu0 0
        %1302 = vmatpush1.bf16.msra.mxu0 %v1126
        %1303 = vmatprep.subr.bf16.mxu0 0
        %1304 = vmatpush1.bf16.msra.mxu0 %v1127
        %1305 = vmatprep.subr.bf16.mxu0 0
        %1306 = vmatpush1.bf16.msra.mxu0 %v1128
        %1307 = vmatprep.mubr.bf16.mxu0 %v755
        %1308 = vmatmul.mubr.bf16.gmra.mrb[0].mxu0 %v754
        %v1309 = vpop.f32.mrb[0].mxu0
        %v1310 = vadd.f32 %v1269, %v1309
        %v1311 = vpop.f32.mrb[0].mxu0
        %v1312 = vpop.f32.mrb[0].mxu0
        %v1313 = vadd.f32 %v1272, %v1312
        %v1314 = vpop.f32.mrb[0].mxu0
        %1315 = vdwg.mxu0
        %1316 = vmatprep.subr.bf16.mxu0 0
        %1317 = vmatpush1.bf16.msra.mxu0 %v1129
        %1318 = vmatprep.subr.bf16.mxu0 0
        %1319 = vmatpush1.bf16.msra.mxu0 %v1130
        %1320 = vmatprep.subr.bf16.mxu0 0
        %1321 = vmatpush1.bf16.msra.mxu0 %v1131
        %1322 = vmatprep.subr.bf16.mxu0 0
        %1323 = vmatpush1.bf16.msra.mxu0 %v1132
        %1324 = vmatprep.subr.bf16.mxu0 0
        %1325 = vmatpush1.bf16.msra.mxu0 %v1133
        %1326 = vmatprep.subr.bf16.mxu0 0
        %1327 = vmatpush1.bf16.msra.mxu0 %v1134
        %1328 = vmatprep.subr.bf16.mxu0 0
        %1329 = vmatpush1.bf16.msra.mxu0 0
        %1330 = vmatprep.subr.bf16.mxu0 0
        %1331 = vmatpush1.bf16.msra.mxu0 0
        %1332 = vmatprep.subr.bf16.mxu0 0
        %1333 = vmatpush1.bf16.msra.mxu0 0
        %1334 = vmatprep.subr.bf16.mxu0 0
        %1335 = vmatpush1.bf16.msra.mxu0 0
        %1336 = vmatprep.subr.bf16.mxu0 0
        %1337 = vmatpush1.bf16.msra.mxu0 0
        %1338 = vmatprep.subr.bf16.mxu0 0
        %1339 = vmatpush1.bf16.msra.mxu0 0
        %1340 = vmatprep.subr.bf16.mxu0 0
        %1341 = vmatpush1.bf16.msra.mxu0 0
        %1342 = vmatprep.subr.bf16.mxu0 0
        %1343 = vmatpush1.bf16.msra.mxu0 0
        %1344 = vmatprep.subr.bf16.mxu0 0
        %1345 = vmatpush1.bf16.msra.mxu0 0
        %1346 = vmatprep.subr.bf16.mxu0 0
        %1347 = vmatpush1.bf16.msra.mxu0 0
        %1348 = vmatprep.mubr.bf16.mxu0 0
        %1349 = vmatmul.mubr.bf16.gmra.mrb[0].mxu0 %v1191
        %v1350 = vpop.f32.mrb[0].mxu0
        %v1351 = vadd.f32 %v1310, %v1350
        %v1352 = vpop.f32.mrb[0].mxu0
        %v1353 = vpop.f32.mrb[0].mxu0
        %v1354 = vadd.f32 %v1313, %v1353
        %v1355 = vpop.f32.mrb[0].mxu0
        %1356 = vdwg.mxu0
        %v1357 = vxor.u32 %v1351, 2147483648
        %v1358 = vxor.u32 %v1354, 2147483648
        %v1359 = vmul.f32 %v1357, 1.442695
        %v1360 = vpow.pop %v1359
        %v1361 = vmul.f32 %v1358, 1.442695
        %v1362 = vpow.pop %v1361
        %v1363 = vadd.f32 %v1360, 1.0
        %v1364 = vadd.f32 %v1362, 1.0
        %v1365 = vrcp.pop %v1363
        %v1366 = vmul.f32 1.0, %v1365
        %v1367 = vrcp.pop %v1364
        %v1368 = vmul.f32 1.0, %v1367
        %v1369 = vld [vmem:[%s5] sm:$0xf]
        %v1370 = vld [vmem:[%s5 + $0x4] sm:$0xf]
        %v1371 = vld [vmem:[%s5 + $0x8] sm:$0xf]
        %v1372 = vld [vmem:[%s5 + $0xc] sm:$0xf]
        %v1373 = vld [vmem:[%s5 + $0x10] sm:$0xf]
        %v1374 = vld [vmem:[%s5 + $0x14] sm:$0xf]
        %v1375 = vld [vmem:[%s5 + $0x18] sm:$0xf]
        %v1376 = vld [vmem:[%s5 + $0x1c] sm:$0xf]
        %v1377 = vld [vmem:[%s5 + $0x20] sm:$0xf]
        %v1378 = vld [vmem:[%s5 + $0x24] sm:$0xf]
        %v1379 = vld [vmem:[%s5 + $0x28] sm:$0xf]
        %v1380 = vld [vmem:[%s5 + $0x2c] sm:$0xf]
        %v1381 = vld [vmem:[%s5 + $0x30] sm:$0xf]
        %v1382 = vld [vmem:[%s5 + $0x34] sm:$0xf]
        %v1383 = vld [vmem:[%s5 + $0x38] sm:$0xf]
        %v1384 = vld [vmem:[%s5 + $0x3c] sm:$0xf]
        %v1385 = vld [vmem:[%s5 + $0x40] sm:$0xf]
        %v1386 = vld [vmem:[%s5 + $0x44] sm:$0xf]
        %v1387 = vld [vmem:[%s5 + $0x48] sm:$0xf]
        %v1388 = vld [vmem:[%s5 + $0x4c] sm:$0xf]
        %v1389 = vld [vmem:[%s5 + $0x50] sm:$0xf]
        %v1390 = vld [vmem:[%s5 + $0x54] sm:$0xf]
        %v1391 = vld [vmem:[%s5 + $0x58] sm:$0xf]
        %v1392 = vld [vmem:[%s5 + $0x5c] sm:$0xf]
        %v1393 = vld [vmem:[%s5 + $0x60] sm:$0xf]
        %v1394 = vld [vmem:[%s5 + $0x64] sm:$0xf]
        %v1395 = vld [vmem:[%s5 + $0x68] sm:$0xf]
        %v1396 = vld [vmem:[%s5 + $0x6c] sm:$0xf]
        %v1397 = vld [vmem:[%s5 + $0x70] sm:$0xf]
        %v1398 = vld [vmem:[%s5 + $0x74] sm:$0xf]
        %v1399 = vld [vmem:[%s5 + $0x78] sm:$0xf]
        %v1400 = vld [vmem:[%s5 + $0x7c] sm:$0xf]
        %v1401 = vld [vmem:[%s5 + $0x80] sm:$0xf]
        %v1402 = vld [vmem:[%s5 + $0x84] sm:$0xf]
        %v1403 = vld [vmem:[%s5 + $0x88] sm:$0xf]
        %v1404 = vld [vmem:[%s5 + $0x8c] sm:$0xf]
        %v1405 = vld [vmem:[%s5 + $0x90] sm:$0xf]
        %v1406 = vld [vmem:[%s5 + $0x94] sm:$0xf]
        %v1407 = vld [vmem:[%s5 + $0x98] sm:$0xf]
        %v1408 = vld [vmem:[%s5 + $0x9c] sm:$0xf]
        %v1409 = vld [vmem:[%s5 + $0xa0] sm:$0xf]
        %v1410 = vld [vmem:[%s5 + $0xa4] sm:$0xf]
        %v1411 = vld [vmem:[%s5 + $0xa8] sm:$0xf]
        %v1412 = vld [vmem:[%s5 + $0xac] sm:$0xf]
        %v1413 = vld [vmem:[%s5 + $0xb0] sm:$0xf]
        %v1414 = vld [vmem:[%s5 + $0xb4] sm:$0xf]
        %v1415 = vld [vmem:[%s5 + $0xb8] sm:$0xf]
        %v1416 = vld [vmem:[%s5 + $0xbc] sm:$0xf]
        %v1417 = vld [vmem:[%s5 + $0xc0] sm:$0xf]
        %v1418 = vld [vmem:[%s5 + $0xc4] sm:$0xf]
        %v1419 = vld [vmem:[%s5 + $0xc8] sm:$0xf]
        %v1420 = vld [vmem:[%s5 + $0xcc] sm:$0xf]
        %v1421 = vld [vmem:[%s5 + $0xd0] sm:$0xf]
        %v1422 = vld [vmem:[%s5 + $0xd4] sm:$0xf]
        %v1423 = vld [vmem:[%s5 + $0xd8] sm:$0xf]
        %v1424 = vld [vmem:[%s5 + $0xdc] sm:$0xf]
        %v1425 = vld [vmem:[%s5 + $0xe0] sm:$0xf]
        %v1426 = vld [vmem:[%s5 + $0xe4] sm:$0xf]
        %v1427 = vld [vmem:[%s5 + $0xe8] sm:$0xf]
        %v1428 = vld [vmem:[%s5 + $0xec] sm:$0xf]
        %v1429 = vld [vmem:[%s5 + $0xf0] sm:$0xf]
        %v1430 = vld [vmem:[%s5 + $0xf4] sm:$0xf]
        %v1431 = vld [vmem:[%s5 + $0xf8] sm:$0xf]
        %v1432 = vld [vmem:[%s5 + $0xfc] sm:$0xf]
        %v1433 = vld [vmem:[%s5 + $0x100] sm:$0xf]
        %v1434 = vld [vmem:[%s5 + $0x104] sm:$0xf]
        %v1435 = vld [vmem:[%s5 + $0x108] sm:$0xf]
        %v1436 = vld [vmem:[%s5 + $0x10c] sm:$0xf]
        %v1437 = vld [vmem:[%s5 + $0x110] sm:$0xf]
        %v1438 = vld [vmem:[%s5 + $0x114] sm:$0xf]
        %v1439 = vld [vmem:[%s5 + $0x118] sm:$0xf]
        %v1440 = vld [vmem:[%s5 + $0x11c] sm:$0xf]
        %v1441 = vld [vmem:[%s5 + $0x120] sm:$0xf]
        %v1442 = vld [vmem:[%s5 + $0x124] sm:$0xf]
        %v1443 = vld [vmem:[%s5 + $0x128] sm:$0xf]
        %v1444 = vld [vmem:[%s5 + $0x12c] sm:$0xf]
        %v1445 = vld [vmem:[%s5 + $0x130] sm:$0xf]
        %v1446 = vld [vmem:[%s5 + $0x134] sm:$0xf]
        %v1447 = vld [vmem:[%s5 + $0x138] sm:$0xf]
        %v1448 = vld [vmem:[%s5 + $0x13c] sm:$0xf]
        %v1449 = vld [vmem:[%s5 + $0x140] sm:$0xf]
        %v1450 = vld [vmem:[%s5 + $0x144] sm:$0xf]
        %v1451 = vld [vmem:[%s5 + $0x148] sm:$0xf]
        %v1452 = vld [vmem:[%s5 + $0x14c] sm:$0xf]
        %v1453 = vld [vmem:[%s5 + $0x150] sm:$0xf]
        %v1454 = vld [vmem:[%s5 + $0x154] sm:$0xf]
        %v1455 = vld [vmem:[%s5 + $0x158] sm:$0xf]
        %v1456 = vld [vmem:[%s5 + $0x15c] sm:$0xf]
        %v1457 = vld [vmem:[%s5 + $0x160] sm:$0xf]
        %v1458 = vld [vmem:[%s5 + $0x164] sm:$0xf]
        %v1459 = vld [vmem:[%s5 + $0x168] sm:$0xf]
        %v1460 = vld [vmem:[%s5 + $0x16c] sm:$0xf]
        %v1461 = vld [vmem:[%s5 + $0x170] sm:$0xf]
        %v1462 = vld [vmem:[%s5 + $0x174] sm:$0xf]
        %v1463 = vld [vmem:[%s5 + $0x178] sm:$0xf]
        %v1464 = vld [vmem:[%s5 + $0x17c] sm:$0xf]
        %v1465 = vld [vmem:[%s5 + $0x180] sm:$0xf]
        %v1466 = vld [vmem:[%s5 + $0x184] sm:$0xf]
        %v1467 = vld [vmem:[%s5 + $0x188] sm:$0xf]
        %v1468 = vld [vmem:[%s5 + $0x18c] sm:$0xf]
        %v1469 = vld [vmem:[%s5 + $0x190] sm:$0xf]
        %v1470 = vld [vmem:[%s5 + $0x194] sm:$0xf]
        %v1471 = vld [vmem:[%s5 + $0x198] sm:$0xf]
        %v1472 = vld [vmem:[%s5 + $0x19c] sm:$0xf]
        %v1473 = vld [vmem:[%s5 + $0x1a0] sm:$0xf]
        %v1474 = vld [vmem:[%s5 + $0x1a4] sm:$0xf]
        %v1475 = vld [vmem:[%s5 + $0x1a8] sm:$0xf]
        %v1476 = vld [vmem:[%s5 + $0x1ac] sm:$0xf]
        %v1585 = vunpack.c.l.b16 %v1369
        %v1586 = vunpack.c.l.b16 %v1370
        %v1587 = vunpack.c.l.b16 %v1371
        %v1588 = vunpack.c.l.b16 %v1372
        %v1589 = vunpack.c.l.b16 %v1373
        %v1590 = vunpack.c.l.b16 %v1374
        %v1591 = vunpack.c.l.b16 %v1375
        %v1592 = vunpack.c.l.b16 %v1376
        %v1593 = vunpack.c.l.b16 %v1377
        %v1594 = vunpack.c.l.b16 %v1378
        %v1595 = vunpack.c.l.b16 %v1379
        %v1596 = vunpack.c.l.b16 %v1380
        %v1597 = vunpack.c.l.b16 %v1381
        %v1598 = vunpack.c.l.b16 %v1382
        %v1599 = vunpack.c.l.b16 %v1383
        %v1600 = vunpack.c.l.b16 %v1384
        %v1601 = vunpack.c.l.b16 %v1385
        %v1602 = vunpack.c.l.b16 %v1386
        %v1603 = vunpack.c.l.b16 %v1387
        %v1604 = vunpack.c.l.b16 %v1388
        %v1605 = vunpack.c.l.b16 %v1389
        %v1606 = vunpack.c.l.b16 %v1390
        %v1607 = vunpack.c.l.b16 %v1391
        %v1608 = vunpack.c.l.b16 %v1392
        %v1609 = vunpack.c.l.b16 %v1393
        %v1610 = vunpack.c.l.b16 %v1394
        %v1611 = vunpack.c.l.b16 %v1395
        %v1612 = vunpack.c.l.b16 %v1396
        %v1613 = vunpack.c.l.b16 %v1397
        %v1614 = vunpack.c.l.b16 %v1398
        %v1615 = vunpack.c.l.b16 %v1399
        %v1616 = vunpack.c.l.b16 %v1400
        %v1617 = vunpack.c.l.b16 %v1401
        %v1618 = vunpack.c.l.b16 %v1402
        %v1619 = vunpack.c.l.b16 %v1403
        %v1620 = vunpack.c.l.b16 %v1404
        %v1621 = vunpack.c.l.b16 %v1405
        %v1622 = vunpack.c.l.b16 %v1406
        %v1623 = vunpack.c.l.b16 %v1407
        %v1624 = vunpack.c.l.b16 %v1408
        %v1625 = vunpack.c.l.b16 %v1409
        %v1626 = vunpack.c.l.b16 %v1410
        %v1627 = vunpack.c.l.b16 %v1411
        %v1628 = vunpack.c.l.b16 %v1412
        %v1629 = vunpack.c.l.b16 %v1413
        %v1630 = vunpack.c.l.b16 %v1414
        %v1631 = vunpack.c.l.b16 %v1415
        %v1632 = vunpack.c.l.b16 %v1416
        %v1633 = vunpack.c.l.b16 %v1417
        %v1634 = vunpack.c.l.b16 %v1418
        %v1635 = vunpack.c.l.b16 %v1419
        %v1636 = vunpack.c.l.b16 %v1420
        %v1637 = vunpack.c.l.b16 %v1421
        %v1638 = vunpack.c.l.b16 %v1422
        %v1639 = vunpack.c.l.b16 %v1423
        %v1640 = vunpack.c.l.b16 %v1424
        %v1641 = vunpack.c.l.b16 %v1425
        %v1642 = vunpack.c.l.b16 %v1426
        %v1643 = vunpack.c.l.b16 %v1427
        %v1644 = vunpack.c.l.b16 %v1428
        %v1645 = vunpack.c.l.b16 %v1429
        %v1646 = vunpack.c.l.b16 %v1430
        %v1647 = vunpack.c.l.b16 %v1431
        %v1648 = vunpack.c.l.b16 %v1432
        %v1649 = vunpack.c.l.b16 %v1433
        %v1650 = vunpack.c.l.b16 %v1434
        %v1651 = vunpack.c.l.b16 %v1435
        %v1652 = vunpack.c.l.b16 %v1436
        %v1653 = vunpack.c.l.b16 %v1437
        %v1654 = vunpack.c.l.b16 %v1438
        %v1655 = vunpack.c.l.b16 %v1439
        %v1656 = vunpack.c.l.b16 %v1440
        %v1657 = vunpack.c.l.b16 %v1441
        %v1658 = vunpack.c.l.b16 %v1442
        %v1659 = vunpack.c.l.b16 %v1443
        %v1660 = vunpack.c.l.b16 %v1444
        %v1661 = vunpack.c.l.b16 %v1445
        %v1662 = vunpack.c.l.b16 %v1446
        %v1663 = vunpack.c.l.b16 %v1447
        %v1664 = vunpack.c.l.b16 %v1448
        %v1665 = vunpack.c.l.b16 %v1449
        %v1666 = vunpack.c.l.b16 %v1450
        %v1667 = vunpack.c.l.b16 %v1451
        %v1668 = vunpack.c.l.b16 %v1452
        %v1669 = vunpack.c.l.b16 %v1453
        %v1670 = vunpack.c.l.b16 %v1454
        %v1671 = vunpack.c.l.b16 %v1455
        %v1672 = vunpack.c.l.b16 %v1456
        %v1673 = vunpack.c.l.b16 %v1457
        %v1674 = vunpack.c.l.b16 %v1458
        %v1675 = vunpack.c.l.b16 %v1459
        %v1676 = vunpack.c.l.b16 %v1460
        %v1677 = vunpack.c.l.b16 %v1461
        %v1678 = vunpack.c.l.b16 %v1462
        %v1679 = vunpack.c.l.b16 %v1463
        %v1680 = vunpack.c.l.b16 %v1464
        %v1681 = vunpack.c.l.b16 %v1465
        %v1682 = vunpack.c.l.b16 %v1466
        %v1683 = vunpack.c.l.b16 %v1467
        %v1684 = vunpack.c.l.b16 %v1468
        %v1685 = vunpack.c.l.b16 %v1469
        %v1686 = vunpack.c.l.b16 %v1470
        %v1687 = vunpack.c.l.b16 %v1471
        %v1688 = vunpack.c.l.b16 %v1472
        %v1689 = vunpack.c.l.b16 %v1473
        %v1690 = vunpack.c.l.b16 %v1474
        %v1691 = vunpack.c.l.b16 %v1475
        %v1692 = vunpack.c.l.b16 %v1476
        %v1693 = vpack.c.b16 %v1586, %v1585
        %v1694 = vpack.c.b16 %v1588, %v1587
        %v1695 = vpack.c.b16 %v1590, %v1589
        %v1696 = vpack.c.b16 %v1592, %v1591
        %v1697 = vpack.c.b16 %v1594, %v1593
        %v1698 = vpack.c.b16 %v1596, %v1595
        %v1699 = vpack.c.b16 %v1598, %v1597
        %v1700 = vpack.c.b16 %v1600, %v1599
        %v1701 = vpack.c.b16 %v1602, %v1601
        %v1702 = vpack.c.b16 %v1604, %v1603
        %v1703 = vpack.c.b16 %v1606, %v1605
        %v1704 = vpack.c.b16 %v1608, %v1607
        %v1705 = vpack.c.b16 %v1610, %v1609
        %v1706 = vpack.c.b16 %v1612, %v1611
        %v1707 = vpack.c.b16 %v1614, %v1613
        %v1708 = vpack.c.b16 %v1616, %v1615
        %v1709 = vpack.c.b16 %v1618, %v1617
        %v1710 = vpack.c.b16 %v1620, %v1619
        %v1711 = vpack.c.b16 %v1622, %v1621
        %v1712 = vpack.c.b16 %v1624, %v1623
        %v1713 = vpack.c.b16 %v1626, %v1625
        %v1714 = vpack.c.b16 %v1628, %v1627
        %v1715 = vpack.c.b16 %v1630, %v1629
        %v1716 = vpack.c.b16 %v1632, %v1631
        %v1717 = vpack.c.b16 %v1634, %v1633
        %v1718 = vpack.c.b16 %v1636, %v1635
        %v1719 = vpack.c.b16 %v1638, %v1637
        %v1720 = vpack.c.b16 %v1640, %v1639
        %v1721 = vpack.c.b16 %v1642, %v1641
        %v1722 = vpack.c.b16 %v1644, %v1643
        %v1723 = vpack.c.b16 %v1646, %v1645
        %v1724 = vpack.c.b16 %v1648, %v1647
        %v1725 = vpack.c.b16 %v1650, %v1649
        %v1726 = vpack.c.b16 %v1652, %v1651
        %v1727 = vpack.c.b16 %v1654, %v1653
        %v1728 = vpack.c.b16 %v1656, %v1655
        %v1729 = vpack.c.b16 %v1658, %v1657
        %v1730 = vpack.c.b16 %v1660, %v1659
        %v1731 = vpack.c.b16 %v1662, %v1661
        %v1732 = vpack.c.b16 %v1664, %v1663
        %v1733 = vpack.c.b16 %v1666, %v1665
        %v1734 = vpack.c.b16 %v1668, %v1667
        %v1735 = vpack.c.b16 %v1670, %v1669
        %v1736 = vpack.c.b16 %v1672, %v1671
        %v1737 = vpack.c.b16 %v1674, %v1673
        %v1738 = vpack.c.b16 %v1676, %v1675
        %v1739 = vpack.c.b16 %v1678, %v1677
        %v1740 = vpack.c.b16 %v1680, %v1679
        %v1741 = vpack.c.b16 %v1682, %v1681
        %v1742 = vpack.c.b16 %v1684, %v1683
        %v1743 = vpack.c.b16 %v1686, %v1685
        %v1744 = vpack.c.b16 %v1688, %v1687
        %v1745 = vpack.c.b16 %v1690, %v1689
        %v1746 = vpack.c.b16 %v1692, %v1691
        %1801 = vmatprep.subr.bf16.mxu0 0
        %1802 = vmatpush1.bf16.msra.mxu0 %v1693
        %1803 = vmatprep.subr.bf16.mxu0 0
        %1804 = vmatpush1.bf16.msra.mxu0 %v1694
        %1805 = vmatprep.subr.bf16.mxu0 0
        %1806 = vmatpush1.bf16.msra.mxu0 %v1695
        %1807 = vmatprep.subr.bf16.mxu0 0
        %1808 = vmatpush1.bf16.msra.mxu0 %v1696
        %1809 = vmatprep.subr.bf16.mxu0 0
        %1810 = vmatpush1.bf16.msra.mxu0 %v1697
        %1811 = vmatprep.subr.bf16.mxu0 0
        %1812 = vmatpush1.bf16.msra.mxu0 %v1698
        %1813 = vmatprep.subr.bf16.mxu0 0
        %1814 = vmatpush1.bf16.msra.mxu0 %v1699
        %1815 = vmatprep.subr.bf16.mxu0 0
        %1816 = vmatpush1.bf16.msra.mxu0 %v1700
        %1817 = vmatprep.subr.bf16.mxu0 0
        %1818 = vmatpush1.bf16.msra.mxu0 %v1701
        %1819 = vmatprep.subr.bf16.mxu0 0
        %1820 = vmatpush1.bf16.msra.mxu0 %v1702
        %1821 = vmatprep.subr.bf16.mxu0 0
        %1822 = vmatpush1.bf16.msra.mxu0 %v1703
        %1823 = vmatprep.subr.bf16.mxu0 0
        %1824 = vmatpush1.bf16.msra.mxu0 %v1704
        %1825 = vmatprep.subr.bf16.mxu0 0
        %1826 = vmatpush1.bf16.msra.mxu0 %v1705
        %1827 = vmatprep.subr.bf16.mxu0 0
        %1828 = vmatpush1.bf16.msra.mxu0 %v1706
        %1829 = vmatprep.subr.bf16.mxu0 0
        %1830 = vmatpush1.bf16.msra.mxu0 %v1707
        %1831 = vmatprep.subr.bf16.mxu0 0
        %1832 = vmatpush1.bf16.msra.mxu0 %v1708
        %1833 = vmatprep.mubr.bf16.mxu0 %v751
        %1834 = vmatmul.mubr.bf16.gmra.mrb[0].mxu0 %v750
        %v1835 = vpop.f32.mrb[0].mxu0
        %v1836 = vadd.f32 %v391, %v1835
        %v1837 = vpop.f32.mrb[0].mxu0
        %v1838 = vpop.f32.mrb[0].mxu0
        %v1839 = vadd.f32 %v392, %v1838
        %v1840 = vpop.f32.mrb[0].mxu0
        %1841 = vdwg.mxu0
        %1842 = vmatprep.subr.bf16.mxu0 0
        %1843 = vmatpush1.bf16.msra.mxu0 %v1709
        %1844 = vmatprep.subr.bf16.mxu0 0
        %1845 = vmatpush1.bf16.msra.mxu0 %v1710
        %1846 = vmatprep.subr.bf16.mxu0 0
        %1847 = vmatpush1.bf16.msra.mxu0 %v1711
        %1848 = vmatprep.subr.bf16.mxu0 0
        %1849 = vmatpush1.bf16.msra.mxu0 %v1712
        %1850 = vmatprep.subr.bf16.mxu0 0
        %1851 = vmatpush1.bf16.msra.mxu0 %v1713
        %1852 = vmatprep.subr.bf16.mxu0 0
        %1853 = vmatpush1.bf16.msra.mxu0 %v1714
        %1854 = vmatprep.subr.bf16.mxu0 0
        %1855 = vmatpush1.bf16.msra.mxu0 %v1715
        %1856 = vmatprep.subr.bf16.mxu0 0
        %1857 = vmatpush1.bf16.msra.mxu0 %v1716
        %1858 = vmatprep.subr.bf16.mxu0 0
        %1859 = vmatpush1.bf16.msra.mxu0 %v1717
        %1860 = vmatprep.subr.bf16.mxu0 0
        %1861 = vmatpush1.bf16.msra.mxu0 %v1718
        %1862 = vmatprep.subr.bf16.mxu0 0
        %1863 = vmatpush1.bf16.msra.mxu0 %v1719
        %1864 = vmatprep.subr.bf16.mxu0 0
        %1865 = vmatpush1.bf16.msra.mxu0 %v1720
        %1866 = vmatprep.subr.bf16.mxu0 0
        %1867 = vmatpush1.bf16.msra.mxu0 %v1721
        %1868 = vmatprep.subr.bf16.mxu0 0
        %1869 = vmatpush1.bf16.msra.mxu0 %v1722
        %1870 = vmatprep.subr.bf16.mxu0 0
        %1871 = vmatpush1.bf16.msra.mxu0 %v1723
        %1872 = vmatprep.subr.bf16.mxu0 0
        %1873 = vmatpush1.bf16.msra.mxu0 %v1724
        %1874 = vmatprep.mubr.bf16.mxu0 %v753
        %1875 = vmatmul.mubr.bf16.gmra.mrb[0].mxu0 %v752
        %v1876 = vpop.f32.mrb[0].mxu0
        %v1877 = vadd.f32 %v1836, %v1876
        %v1878 = vpop.f32.mrb[0].mxu0
        %v1879 = vpop.f32.mrb[0].mxu0
        %v1880 = vadd.f32 %v1839, %v1879
        %v1881 = vpop.f32.mrb[0].mxu0
        %1882 = vdwg.mxu0
        %1883 = vmatprep.subr.bf16.mxu0 0
        %1884 = vmatpush1.bf16.msra.mxu0 %v1725
        %1885 = vmatprep.subr.bf16.mxu0 0
        %1886 = vmatpush1.bf16.msra.mxu0 %v1726
        %1887 = vmatprep.subr.bf16.mxu0 0
        %1888 = vmatpush1.bf16.msra.mxu0 %v1727
        %1889 = vmatprep.subr.bf16.mxu0 0
        %1890 = vmatpush1.bf16.msra.mxu0 %v1728
        %1891 = vmatprep.subr.bf16.mxu0 0
        %1892 = vmatpush1.bf16.msra.mxu0 %v1729
        %1893 = vmatprep.subr.bf16.mxu0 0
        %1894 = vmatpush1.bf16.msra.mxu0 %v1730
        %1895 = vmatprep.subr.bf16.mxu0 0
        %1896 = vmatpush1.bf16.msra.mxu0 %v1731
        %1897 = vmatprep.subr.bf16.mxu0 0
        %1898 = vmatpush1.bf16.msra.mxu0 %v1732
        %1899 = vmatprep.subr.bf16.mxu0 0
        %1900 = vmatpush1.bf16.msra.mxu0 %v1733
        %1901 = vmatprep.subr.bf16.mxu0 0
        %1902 = vmatpush1.bf16.msra.mxu0 %v1734
        %1903 = vmatprep.subr.bf16.mxu0 0
        %1904 = vmatpush1.bf16.msra.mxu0 %v1735
        %1905 = vmatprep.subr.bf16.mxu0 0
        %1906 = vmatpush1.bf16.msra.mxu0 %v1736
        %1907 = vmatprep.subr.bf16.mxu0 0
        %1908 = vmatpush1.bf16.msra.mxu0 %v1737
        %1909 = vmatprep.subr.bf16.mxu0 0
        %1910 = vmatpush1.bf16.msra.mxu0 %v1738
        %1911 = vmatprep.subr.bf16.mxu0 0
        %1912 = vmatpush1.bf16.msra.mxu0 %v1739
        %1913 = vmatprep.subr.bf16.mxu0 0
        %1914 = vmatpush1.bf16.msra.mxu0 %v1740
        %1915 = vmatprep.mubr.bf16.mxu0 %v755
        %1916 = vmatmul.mubr.bf16.gmra.mrb[0].mxu0 %v754
        %v1917 = vpop.f32.mrb[0].mxu0
        %v1918 = vadd.f32 %v1877, %v1917
        %v1919 = vpop.f32.mrb[0].mxu0
        %v1920 = vpop.f32.mrb[0].mxu0
        %v1921 = vadd.f32 %v1880, %v1920
        %v1922 = vpop.f32.mrb[0].mxu0
        %1923 = vdwg.mxu0
        %1924 = vmatprep.subr.bf16.mxu0 0
        %1925 = vmatpush1.bf16.msra.mxu0 %v1741
        %1926 = vmatprep.subr.bf16.mxu0 0
        %1927 = vmatpush1.bf16.msra.mxu0 %v1742
        %1928 = vmatprep.subr.bf16.mxu0 0
        %1929 = vmatpush1.bf16.msra.mxu0 %v1743
        %1930 = vmatprep.subr.bf16.mxu0 0
        %1931 = vmatpush1.bf16.msra.mxu0 %v1744
        %1932 = vmatprep.subr.bf16.mxu0 0
        %1933 = vmatpush1.bf16.msra.mxu0 %v1745
        %1934 = vmatprep.subr.bf16.mxu0 0
        %1935 = vmatpush1.bf16.msra.mxu0 %v1746
        %1936 = vmatprep.subr.bf16.mxu0 0
        %1937 = vmatpush1.bf16.msra.mxu0 0
        %1938 = vmatprep.subr.bf16.mxu0 0
        %1939 = vmatpush1.bf16.msra.mxu0 0
        %1940 = vmatprep.subr.bf16.mxu0 0
        %1941 = vmatpush1.bf16.msra.mxu0 0
        %1942 = vmatprep.subr.bf16.mxu0 0
        %1943 = vmatpush1.bf16.msra.mxu0 0
        %1944 = vmatprep.subr.bf16.mxu0 0
        %1945 = vmatpush1.bf16.msra.mxu0 0
        %1946 = vmatprep.subr.bf16.mxu0 0
        %1947 = vmatpush1.bf16.msra.mxu0 0
        %1948 = vmatprep.subr.bf16.mxu0 0
        %1949 = vmatpush1.bf16.msra.mxu0 0
        %1950 = vmatprep.subr.bf16.mxu0 0
        %1951 = vmatpush1.bf16.msra.mxu0 0
        %1952 = vmatprep.subr.bf16.mxu0 0
        %1953 = vmatpush1.bf16.msra.mxu0 0
        %1954 = vmatprep.subr.bf16.mxu0 0
        %1955 = vmatpush1.bf16.msra.mxu0 0
        %1956 = vmatprep.mubr.bf16.mxu0 0
        %1957 = vmatmul.mubr.bf16.gmra.mrb[0].mxu0 %v1191
        %v1958 = vpop.f32.mrb[0].mxu0
        %v1959 = vadd.f32 %v1918, %v1958
        %v1960 = vpop.f32.mrb[0].mxu0
        %v1961 = vpop.f32.mrb[0].mxu0
        %v1962 = vadd.f32 %v1921, %v1961
        %v1963 = vpop.f32.mrb[0].mxu0
        %1964 = vdwg.mxu0
        %v1965 = vxor.u32 %v1959, 2147483648
        %v1966 = vxor.u32 %v1962, 2147483648
        %v1967 = vmul.f32 %v1965, 1.442695
        %v1968 = vpow.pop %v1967
        %v1969 = vmul.f32 %v1966, 1.442695
        %v1970 = vpow.pop %v1969
        %v1971 = vadd.f32 %v1968, 1.0
        %v1972 = vadd.f32 %v1970, 1.0
        %v1973 = vrcp.pop %v1971
        %v1974 = vmul.f32 1.0, %v1973
        %v1975 = vrcp.pop %v1972
        %v1976 = vmul.f32 1.0, %v1975
        %v1977 = vmul.f32 %v1366, %v381
        %v1978 = vmul.f32 %v1368, %v382
        %1981 = vrot.lane.b32.xlu0 %v1977, 4
        %v1982 = vpop.permute.xlu0 %1981
        %1983 = vrot.lane.b32.xlu0 %v1978, 4
        %v1984 = vpop.permute.xlu0 %1983
        %v1987 = vsel %vm403, %v379, %v1982
        %v1988 = vsel %vm403, %v380, %v1984
        %1989 = vmatprep.subr.mxu0 0.0
        %1990 = vmatpush1.msra.mxu0 %v1987
        %1991 = vmatprep.subr.mxu0 0.0
        %1992 = vmatpush1.msra.mxu0 %v1988
        %1993 = vmatprep.subr.mxu0 0.0
        %1994 = vmatpush1.msra.mxu0 0.0
        %1995 = vmatprep.subr.mxu0 0.0
        %1996 = vmatpush1.msra.mxu0 0.0
        %1997 = vmatprep.subr.mxu0 0.0
        %1998 = vmatpush1.msra.mxu0 0.0
        %1999 = vmatprep.subr.mxu0 0.0
        %2000 = vmatpush1.msra.mxu0 0.0
        %2001 = vmatprep.subr.mxu0 0.0
        %2002 = vmatpush1.msra.mxu0 0.0
        %2003 = vmatprep.subr.mxu0 0.0
        %2004 = vmatpush1.msra.mxu0 0.0
        %2005 = vmatprep.subr.mxu0 0.0
        %2006 = vmatpush1.msra.mxu0 0.0
        %2007 = vmatprep.subr.mxu0 0.0
        %2008 = vmatpush1.msra.mxu0 0.0
        %2009 = vmatprep.subr.mxu0 0.0
        %2010 = vmatpush1.msra.mxu0 0.0
        %2011 = vmatprep.subr.mxu0 0.0
        %2012 = vmatpush1.msra.mxu0 0.0
        %2013 = vmatprep.subr.mxu0 0.0
        %2014 = vmatpush1.msra.mxu0 0.0
        %2015 = vmatprep.subr.mxu0 0.0
        %2016 = vmatpush1.msra.mxu0 0.0
        %2017 = vmatprep.subr.mxu0 0.0
        %2018 = vmatpush1.msra.mxu0 0.0
        %2019 = vmatprep.subr.mxu0 0.0
        %2020 = vmatpush1.msra.mxu0 0.0
        %2021 = vmatprep.subr.mxu0 0.0
        %2022 = vmatpush1.msra.mxu0 0.0
        %2023 = vmatprep.subr.mxu0 0.0
        %2024 = vmatpush1.msra.mxu0 0.0
        %2025 = vmatprep.subr.mxu0 0.0
        %2026 = vmatpush1.msra.mxu0 0.0
        %2027 = vmatprep.subr.mxu0 0.0
        %2028 = vmatpush1.msra.mxu0 0.0
        %2029 = vmatprep.subr.mxu0 0.0
        %2030 = vmatpush1.msra.mxu0 0.0
        %2031 = vmatprep.subr.mxu0 0.0
        %2032 = vmatpush1.msra.mxu0 0.0
        %2033 = vmatprep.subr.mxu0 0.0
        %2034 = vmatpush1.msra.mxu0 0.0
        %2035 = vmatprep.subr.mxu0 0.0
        %2036 = vmatpush1.msra.mxu0 0.0
        %2037 = vmatprep.subr.mxu0 0.0
        %2038 = vmatpush1.msra.mxu0 0.0
        %2039 = vmatprep.subr.mxu0 0.0
        %2040 = vmatpush1.msra.mxu0 0.0
        %2041 = vmatprep.subr.mxu0 0.0
        %2042 = vmatpush1.msra.mxu0 0.0
        %2043 = vmatprep.subr.mxu0 0.0
        %2044 = vmatpush1.msra.mxu0 0.0
        %2045 = vmatprep.subr.mxu0 0.0
        %2046 = vmatpush1.msra.mxu0 0.0
        %2047 = vmatprep.subr.mxu0 0.0
        %2048 = vmatpush1.msra.mxu0 0.0
        %2049 = vmatprep.subr.mxu0 0.0
        %2050 = vmatpush1.msra.mxu0 0.0
        %2051 = vmatprep.subr.mxu0 0.0
        %2052 = vmatpush1.msra.mxu0 0.0
        %2053 = vmatprep.mubr.f32.mxu0 0.0
        %2054 = vmatmul.mubr.f32.gmra.mrb[0].mxu0 %v408
        %v2055 = vpop.f32.mrb[0].mxu0
        %v2056 = vadd.f32 0.0, %v2055
        %v2057 = vpop.f32.mrb[0].mxu0
        %2058 = vmatprep.mubr.f32.mxu0 0.0
        %2059 = vmatmul.mubr.f32.gmra.mrb[0].mxu0 %v411
        %v2060 = vpop.f32.mrb[0].mxu0
        %v2061 = vadd.f32 0.0, %v2060
        %v2062 = vpop.f32.mrb[0].mxu0
        %2063 = vdwg.mxu0
        %2064 = vmatprep.subr.mxu0 0.0
        %2065 = vmatpush1.msra.mxu0 %v1987
        %2066 = vmatprep.subr.mxu0 0.0
        %2067 = vmatpush1.msra.mxu0 %v1988
        %2068 = vmatprep.subr.mxu0 0.0
        %2069 = vmatpush1.msra.mxu0 0.0
        %2070 = vmatprep.subr.mxu0 0.0
        %2071 = vmatpush1.msra.mxu0 0.0
        %2072 = vmatprep.subr.mxu0 0.0
        %2073 = vmatpush1.msra.mxu0 0.0
        %2074 = vmatprep.subr.mxu0 0.0
        %2075 = vmatpush1.msra.mxu0 0.0
        %2076 = vmatprep.subr.mxu0 0.0
        %2077 = vmatpush1.msra.mxu0 0.0
        %2078 = vmatprep.subr.mxu0 0.0
        %2079 = vmatpush1.msra.mxu0 0.0
        %2080 = vmatprep.subr.mxu0 0.0
        %2081 = vmatpush1.msra.mxu0 0.0
        %2082 = vmatprep.subr.mxu0 0.0
        %2083 = vmatpush1.msra.mxu0 0.0
        %2084 = vmatprep.subr.mxu0 0.0
        %2085 = vmatpush1.msra.mxu0 0.0
        %2086 = vmatprep.subr.mxu0 0.0
        %2087 = vmatpush1.msra.mxu0 0.0
        %2088 = vmatprep.subr.mxu0 0.0
        %2089 = vmatpush1.msra.mxu0 0.0
        %2090 = vmatprep.subr.mxu0 0.0
        %2091 = vmatpush1.msra.mxu0 0.0
        %2092 = vmatprep.subr.mxu0 0.0
        %2093 = vmatpush1.msra.mxu0 0.0
        %2094 = vmatprep.subr.mxu0 0.0
        %2095 = vmatpush1.msra.mxu0 0.0
        %2096 = vmatprep.subr.mxu0 0.0
        %2097 = vmatpush1.msra.mxu0 0.0
        %2098 = vmatprep.subr.mxu0 0.0
        %2099 = vmatpush1.msra.mxu0 0.0
        %2100 = vmatprep.subr.mxu0 0.0
        %2101 = vmatpush1.msra.mxu0 0.0
        %2102 = vmatprep.subr.mxu0 0.0
        %2103 = vmatpush1.msra.mxu0 0.0
        %2104 = vmatprep.subr.mxu0 0.0
        %2105 = vmatpush1.msra.mxu0 0.0
        %2106 = vmatprep.subr.mxu0 0.0
        %2107 = vmatpush1.msra.mxu0 0.0
        %2108 = vmatprep.subr.mxu0 0.0
        %2109 = vmatpush1.msra.mxu0 0.0
        %2110 = vmatprep.subr.mxu0 0.0
        %2111 = vmatpush1.msra.mxu0 0.0
        %2112 = vmatprep.subr.mxu0 0.0
        %2113 = vmatpush1.msra.mxu0 0.0
        %2114 = vmatprep.subr.mxu0 0.0
        %2115 = vmatpush1.msra.mxu0 0.0
        %2116 = vmatprep.subr.mxu0 0.0
        %2117 = vmatpush1.msra.mxu0 0.0
        %2118 = vmatprep.subr.mxu0 0.0
        %2119 = vmatpush1.msra.mxu0 0.0
        %2120 = vmatprep.subr.mxu0 0.0
        %2121 = vmatpush1.msra.mxu0 0.0
        %2122 = vmatprep.subr.mxu0 0.0
        %2123 = vmatpush1.msra.mxu0 0.0
        %2124 = vmatprep.subr.mxu0 0.0
        %2125 = vmatpush1.msra.mxu0 0.0
        %2126 = vmatprep.subr.mxu0 0.0
        %2127 = vmatpush1.msra.mxu0 0.0
        %2128 = vmatprep.mubr.f32.mxu0 0.0
        %2129 = vmatmul.mubr.f32.gmra.mrb[0].mxu0 %v489
        %v2130 = vpop.f32.mrb[0].mxu0
        %v2131 = vadd.f32 0.0, %v2130
        %v2132 = vpop.f32.mrb[0].mxu0
        %2133 = vmatprep.mubr.f32.mxu0 0.0
        %2134 = vmatmul.mubr.f32.gmra.mrb[0].mxu0 %v492
        %v2135 = vpop.f32.mrb[0].mxu0
        %v2136 = vadd.f32 0.0, %v2135
        %v2137 = vpop.f32.mrb[0].mxu0
        %2138 = vdwg.mxu0
        %2141 = vrot.lane.b32.xlu0 %v2056, 36
        %v2142 = vpop.permute.xlu0 %2141
        %2143 = vrot.lane.b32.xlu0 %v2061, 36
        %v2144 = vpop.permute.xlu0 %2143
        %2149 = vrot.lane.b32.xlu0 %v2131, 72
        %v2150 = vpop.permute.xlu0 %2149
        %2151 = vrot.lane.b32.xlu0 %v2136, 72
        %v2152 = vpop.permute.xlu0 %2151
        %v2155 = vsel %vm585, %v1987, %v2142
        %v2156 = vsel %vm585, %v1988, %v2144
        %v2157 = vsel %vm588, %v2155, %v2150
        %v2158 = vsel %vm588, %v2156, %v2152
        %v2159 = vmul.f32 %v594, %v2157
        %v2160 = vmul.f32 %v599, %v2158
        %v2161 = vmul.f32 %v605, %v2157
        %v2162 = vmul.f32 %v609, %v2158
        %v2163 = vmul.f32 %v615, %v2157
        %v2164 = vmul.f32 %v619, %v2158
        %v2165 = vmul.f32 %v625, %v2157
        %v2166 = vmul.f32 %v629, %v2158
        %v2167 = vmul.f32 %v635, %v2157
        %v2168 = vmul.f32 %v639, %v2158
        %v2169 = vmul.f32 %v645, %v2157
        %v2170 = vmul.f32 %v649, %v2158
        %v2171 = vmul.f32 %v655, %v2157
        %v2172 = vmul.f32 %v659, %v2158
        %v2173 = vmul.f32 %v665, %v2157
        %v2174 = vmul.f32 %v669, %v2158
        %2177 = vrot.lane.b32.xlu0 %v2161, 108
        %v2178 = vpop.permute.xlu0 %2177
        %2179 = vrot.lane.b32.xlu0 %v2162, 108
        %v2180 = vpop.permute.xlu0 %2179
        %2185 = vrot.lane.b32.xlu0 %v2163, 88
        %v2186 = vpop.permute.xlu0 %2185
        %2187 = vrot.lane.b32.xlu0 %v2164, 88
        %v2188 = vpop.permute.xlu0 %2187
        %2193 = vrot.lane.b32.xlu0 %v2165, 68
        %v2194 = vpop.permute.xlu0 %2193
        %2195 = vrot.lane.b32.xlu0 %v2166, 68
        %v2196 = vpop.permute.xlu0 %2195
        %2201 = vrot.lane.b32.xlu0 %v2167, 48
        %v2202 = vpop.permute.xlu0 %2201
        %2203 = vrot.lane.b32.xlu0 %v2168, 48
        %v2204 = vpop.permute.xlu0 %2203
        %2209 = vrot.lane.b32.xlu0 %v2169, 28
        %v2210 = vpop.permute.xlu0 %2209
        %2211 = vrot.lane.b32.xlu0 %v2170, 28
        %v2212 = vpop.permute.xlu0 %2211
        %2217 = vrot.lane.b32.xlu0 %v2171, 8
        %v2218 = vpop.permute.xlu0 %2217
        %2219 = vrot.lane.b32.xlu0 %v2172, 8
        %v2220 = vpop.permute.xlu0 %2219
        %2225 = vrot.lane.b32.xlu0 %v2173, 116
        %v2226 = vpop.permute.xlu0 %2225
        %2227 = vrot.lane.b32.xlu0 %v2174, 116
        %v2228 = vpop.permute.xlu0 %2227
        %v2231 = vsel %vm729, %v2159, %v2178
        %v2232 = vsel %vm729, %v2160, %v2180
        %v2233 = vsel %vm732, %v2178, %v2186
        %v2234 = vsel %vm732, %v2180, %v2188
        %v2235 = vsel %vm735, %v2186, %v2194
        %v2236 = vsel %vm735, %v2188, %v2196
        %v2237 = vsel %vm738, %v2194, %v2202
        %v2238 = vsel %vm738, %v2196, %v2204
        %v2239 = vsel %vm741, %v2202, %v2210
        %v2240 = vsel %vm741, %v2204, %v2212
        %v2241 = vsel %vm744, %v2210, %v2218
        %v2242 = vsel %vm744, %v2212, %v2220
        %v2243 = vsel %vm747, %v2241, %v2226
        %v2244 = vsel %vm747, %v2242, %v2228
        %v2245 = vpack.c.bf16 %v2232, %v2231
        %v2246 = vpack.c.bf16 %v2234, %v2233
        %v2247 = vpack.c.bf16 %v2236, %v2235
        %v2248 = vpack.c.bf16 %v2238, %v2237
        %v2249 = vpack.c.bf16 %v2240, %v2239
        %v2250 = vpack.c.bf16 %v2244, %v2243
        %v2251 = vpack.c.bf16 %v2228, %v2226
        %v2252 = vld [vmem:[%s6] sm:$0xf]
        %v2253 = vld [vmem:[%s6 + $0x4] sm:$0xf]
        %v2254 = vld [vmem:[%s6 + $0x8] sm:$0xf]
        %v2255 = vld [vmem:[%s6 + $0xc] sm:$0xf]
        %v2256 = vld [vmem:[%s6 + $0x10] sm:$0xf]
        %v2257 = vld [vmem:[%s6 + $0x14] sm:$0xf]
        %v2258 = vld [vmem:[%s6 + $0x18] sm:$0xf]
        %v2259 = vld [vmem:[%s6 + $0x1c] sm:$0xf]
        %v2260 = vld [vmem:[%s6 + $0x20] sm:$0xf]
        %v2261 = vld [vmem:[%s6 + $0x24] sm:$0xf]
        %v2262 = vld [vmem:[%s6 + $0x28] sm:$0xf]
        %v2263 = vld [vmem:[%s6 + $0x2c] sm:$0xf]
        %v2264 = vld [vmem:[%s6 + $0x30] sm:$0xf]
        %v2265 = vld [vmem:[%s6 + $0x34] sm:$0xf]
        %v2266 = vld [vmem:[%s6 + $0x38] sm:$0xf]
        %v2267 = vld [vmem:[%s6 + $0x3c] sm:$0xf]
        %v2268 = vld [vmem:[%s6 + $0x40] sm:$0xf]
        %v2269 = vld [vmem:[%s6 + $0x44] sm:$0xf]
        %v2270 = vld [vmem:[%s6 + $0x48] sm:$0xf]
        %v2271 = vld [vmem:[%s6 + $0x4c] sm:$0xf]
        %v2272 = vld [vmem:[%s6 + $0x50] sm:$0xf]
        %v2273 = vld [vmem:[%s6 + $0x54] sm:$0xf]
        %v2274 = vld [vmem:[%s6 + $0x58] sm:$0xf]
        %v2275 = vld [vmem:[%s6 + $0x5c] sm:$0xf]
        %v2276 = vld [vmem:[%s6 + $0x60] sm:$0xf]
        %v2277 = vld [vmem:[%s6 + $0x64] sm:$0xf]
        %v2278 = vld [vmem:[%s6 + $0x68] sm:$0xf]
        %v2279 = vld [vmem:[%s6 + $0x6c] sm:$0xf]
        %v2280 = vld [vmem:[%s6 + $0x70] sm:$0xf]
        %v2281 = vld [vmem:[%s6 + $0x74] sm:$0xf]
        %v2282 = vld [vmem:[%s6 + $0x78] sm:$0xf]
        %v2283 = vld [vmem:[%s6 + $0x7c] sm:$0xf]
        %v2284 = vld [vmem:[%s6 + $0x80] sm:$0xf]
        %v2285 = vld [vmem:[%s6 + $0x84] sm:$0xf]
        %v2286 = vld [vmem:[%s6 + $0x88] sm:$0xf]
        %v2287 = vld [vmem:[%s6 + $0x8c] sm:$0xf]
        %v2288 = vld [vmem:[%s6 + $0x90] sm:$0xf]
        %v2289 = vld [vmem:[%s6 + $0x94] sm:$0xf]
        %v2290 = vld [vmem:[%s6 + $0x98] sm:$0xf]
        %v2291 = vld [vmem:[%s6 + $0x9c] sm:$0xf]
        %v2292 = vld [vmem:[%s6 + $0xa0] sm:$0xf]
        %v2293 = vld [vmem:[%s6 + $0xa4] sm:$0xf]
        %v2294 = vld [vmem:[%s6 + $0xa8] sm:$0xf]
        %v2295 = vld [vmem:[%s6 + $0xac] sm:$0xf]
        %v2296 = vld [vmem:[%s6 + $0xb0] sm:$0xf]
        %v2297 = vld [vmem:[%s6 + $0xb4] sm:$0xf]
        %v2298 = vld [vmem:[%s6 + $0xb8] sm:$0xf]
        %v2299 = vld [vmem:[%s6 + $0xbc] sm:$0xf]
        %v2300 = vld [vmem:[%s6 + $0xc0] sm:$0xf]
        %v2301 = vld [vmem:[%s6 + $0xc4] sm:$0xf]
        %v2302 = vld [vmem:[%s6 + $0xc8] sm:$0xf]
        %v2303 = vld [vmem:[%s6 + $0xcc] sm:$0xf]
        %v2304 = vld [vmem:[%s6 + $0xd0] sm:$0xf]
        %v2305 = vld [vmem:[%s6 + $0xd4] sm:$0xf]
        %v2306 = vld [vmem:[%s6 + $0xd8] sm:$0xf]
        %v2307 = vld [vmem:[%s6 + $0xdc] sm:$0xf]
        %v2308 = vld [vmem:[%s6 + $0xe0] sm:$0xf]
        %v2309 = vld [vmem:[%s6 + $0xe4] sm:$0xf]
        %v2310 = vld [vmem:[%s6 + $0xe8] sm:$0xf]
        %v2311 = vld [vmem:[%s6 + $0xec] sm:$0xf]
        %v2312 = vld [vmem:[%s6 + $0xf0] sm:$0xf]
        %v2313 = vld [vmem:[%s6 + $0xf4] sm:$0xf]
        %v2314 = vld [vmem:[%s6 + $0xf8] sm:$0xf]
        %v2315 = vld [vmem:[%s6 + $0xfc] sm:$0xf]
        %v2316 = vld [vmem:[%s6 + $0x100] sm:$0xf]
        %v2317 = vld [vmem:[%s6 + $0x104] sm:$0xf]
        %v2318 = vld [vmem:[%s6 + $0x108] sm:$0xf]
        %v2319 = vld [vmem:[%s6 + $0x10c] sm:$0xf]
        %v2320 = vld [vmem:[%s6 + $0x110] sm:$0xf]
        %v2321 = vld [vmem:[%s6 + $0x114] sm:$0xf]
        %v2322 = vld [vmem:[%s6 + $0x118] sm:$0xf]
        %v2323 = vld [vmem:[%s6 + $0x11c] sm:$0xf]
        %v2324 = vld [vmem:[%s6 + $0x120] sm:$0xf]
        %v2325 = vld [vmem:[%s6 + $0x124] sm:$0xf]
        %v2326 = vld [vmem:[%s6 + $0x128] sm:$0xf]
        %v2327 = vld [vmem:[%s6 + $0x12c] sm:$0xf]
        %v2328 = vld [vmem:[%s6 + $0x130] sm:$0xf]
        %v2329 = vld [vmem:[%s6 + $0x134] sm:$0xf]
        %v2330 = vld [vmem:[%s6 + $0x138] sm:$0xf]
        %v2331 = vld [vmem:[%s6 + $0x13c] sm:$0xf]
        %v2332 = vld [vmem:[%s6 + $0x140] sm:$0xf]
        %v2333 = vld [vmem:[%s6 + $0x144] sm:$0xf]
        %v2334 = vld [vmem:[%s6 + $0x148] sm:$0xf]
        %v2335 = vld [vmem:[%s6 + $0x14c] sm:$0xf]
        %v2336 = vld [vmem:[%s6 + $0x150] sm:$0xf]
        %v2337 = vld [vmem:[%s6 + $0x154] sm:$0xf]
        %v2338 = vld [vmem:[%s6 + $0x158] sm:$0xf]
        %v2339 = vld [vmem:[%s6 + $0x15c] sm:$0xf]
        %v2340 = vld [vmem:[%s6 + $0x160] sm:$0xf]
        %v2341 = vld [vmem:[%s6 + $0x164] sm:$0xf]
        %v2342 = vld [vmem:[%s6 + $0x168] sm:$0xf]
        %v2343 = vld [vmem:[%s6 + $0x16c] sm:$0xf]
        %v2344 = vld [vmem:[%s6 + $0x170] sm:$0xf]
        %v2345 = vld [vmem:[%s6 + $0x174] sm:$0xf]
        %v2346 = vld [vmem:[%s6 + $0x178] sm:$0xf]
        %v2347 = vld [vmem:[%s6 + $0x17c] sm:$0xf]
        %v2348 = vld [vmem:[%s6 + $0x180] sm:$0xf]
        %v2349 = vld [vmem:[%s6 + $0x184] sm:$0xf]
        %v2350 = vld [vmem:[%s6 + $0x188] sm:$0xf]
        %v2351 = vld [vmem:[%s6 + $0x18c] sm:$0xf]
        %v2352 = vld [vmem:[%s6 + $0x190] sm:$0xf]
        %v2353 = vld [vmem:[%s6 + $0x194] sm:$0xf]
        %v2354 = vld [vmem:[%s6 + $0x198] sm:$0xf]
        %v2355 = vld [vmem:[%s6 + $0x19c] sm:$0xf]
        %v2356 = vld [vmem:[%s6 + $0x1a0] sm:$0xf]
        %v2357 = vld [vmem:[%s6 + $0x1a4] sm:$0xf]
        %v2358 = vld [vmem:[%s6 + $0x1a8] sm:$0xf]
        %v2359 = vld [vmem:[%s6 + $0x1ac] sm:$0xf]
        %v2468 = vunpack.c.l.b16 %v2252
        %v2469 = vunpack.c.l.b16 %v2253
        %v2470 = vunpack.c.l.b16 %v2254
        %v2471 = vunpack.c.l.b16 %v2255
        %v2472 = vunpack.c.l.b16 %v2256
        %v2473 = vunpack.c.l.b16 %v2257
        %v2474 = vunpack.c.l.b16 %v2258
        %v2475 = vunpack.c.l.b16 %v2259
        %v2476 = vunpack.c.l.b16 %v2260
        %v2477 = vunpack.c.l.b16 %v2261
        %v2478 = vunpack.c.l.b16 %v2262
        %v2479 = vunpack.c.l.b16 %v2263
        %v2480 = vunpack.c.l.b16 %v2264
        %v2481 = vunpack.c.l.b16 %v2265
        %v2482 = vunpack.c.l.b16 %v2266
        %v2483 = vunpack.c.l.b16 %v2267
        %v2484 = vunpack.c.l.b16 %v2268
        %v2485 = vunpack.c.l.b16 %v2269
        %v2486 = vunpack.c.l.b16 %v2270
        %v2487 = vunpack.c.l.b16 %v2271
        %v2488 = vunpack.c.l.b16 %v2272
        %v2489 = vunpack.c.l.b16 %v2273
        %v2490 = vunpack.c.l.b16 %v2274
        %v2491 = vunpack.c.l.b16 %v2275
        %v2492 = vunpack.c.l.b16 %v2276
        %v2493 = vunpack.c.l.b16 %v2277
        %v2494 = vunpack.c.l.b16 %v2278
        %v2495 = vunpack.c.l.b16 %v2279
        %v2496 = vunpack.c.l.b16 %v2280
        %v2497 = vunpack.c.l.b16 %v2281
        %v2498 = vunpack.c.l.b16 %v2282
        %v2499 = vunpack.c.l.b16 %v2283
        %v2500 = vunpack.c.l.b16 %v2284
        %v2501 = vunpack.c.l.b16 %v2285
        %v2502 = vunpack.c.l.b16 %v2286
        %v2503 = vunpack.c.l.b16 %v2287
        %v2504 = vunpack.c.l.b16 %v2288
        %v2505 = vunpack.c.l.b16 %v2289
        %v2506 = vunpack.c.l.b16 %v2290
        %v2507 = vunpack.c.l.b16 %v2291
        %v2508 = vunpack.c.l.b16 %v2292
        %v2509 = vunpack.c.l.b16 %v2293
        %v2510 = vunpack.c.l.b16 %v2294
        %v2511 = vunpack.c.l.b16 %v2295
        %v2512 = vunpack.c.l.b16 %v2296
        %v2513 = vunpack.c.l.b16 %v2297
        %v2514 = vunpack.c.l.b16 %v2298
        %v2515 = vunpack.c.l.b16 %v2299
        %v2516 = vunpack.c.l.b16 %v2300
        %v2517 = vunpack.c.l.b16 %v2301
        %v2518 = vunpack.c.l.b16 %v2302
        %v2519 = vunpack.c.l.b16 %v2303
        %v2520 = vunpack.c.l.b16 %v2304
        %v2521 = vunpack.c.l.b16 %v2305
        %v2522 = vunpack.c.l.b16 %v2306
        %v2523 = vunpack.c.l.b16 %v2307
        %v2524 = vunpack.c.l.b16 %v2308
        %v2525 = vunpack.c.l.b16 %v2309
        %v2526 = vunpack.c.l.b16 %v2310
        %v2527 = vunpack.c.l.b16 %v2311
        %v2528 = vunpack.c.l.b16 %v2312
        %v2529 = vunpack.c.l.b16 %v2313
        %v2530 = vunpack.c.l.b16 %v2314
        %v2531 = vunpack.c.l.b16 %v2315
        %v2532 = vunpack.c.l.b16 %v2316
        %v2533 = vunpack.c.l.b16 %v2317
        %v2534 = vunpack.c.l.b16 %v2318
        %v2535 = vunpack.c.l.b16 %v2319
        %v2536 = vunpack.c.l.b16 %v2320
        %v2537 = vunpack.c.l.b16 %v2321
        %v2538 = vunpack.c.l.b16 %v2322
        %v2539 = vunpack.c.l.b16 %v2323
        %v2540 = vunpack.c.l.b16 %v2324
        %v2541 = vunpack.c.l.b16 %v2325
        %v2542 = vunpack.c.l.b16 %v2326
        %v2543 = vunpack.c.l.b16 %v2327
        %v2544 = vunpack.c.l.b16 %v2328
        %v2545 = vunpack.c.l.b16 %v2329
        %v2546 = vunpack.c.l.b16 %v2330
        %v2547 = vunpack.c.l.b16 %v2331
        %v2548 = vunpack.c.l.b16 %v2332
        %v2549 = vunpack.c.l.b16 %v2333
        %v2550 = vunpack.c.l.b16 %v2334
        %v2551 = vunpack.c.l.b16 %v2335
        %v2552 = vunpack.c.l.b16 %v2336
        %v2553 = vunpack.c.l.b16 %v2337
        %v2554 = vunpack.c.l.b16 %v2338
        %v2555 = vunpack.c.l.b16 %v2339
        %v2556 = vunpack.c.l.b16 %v2340
        %v2557 = vunpack.c.l.b16 %v2341
        %v2558 = vunpack.c.l.b16 %v2342
        %v2559 = vunpack.c.l.b16 %v2343
        %v2560 = vunpack.c.l.b16 %v2344
        %v2561 = vunpack.c.l.b16 %v2345
        %v2562 = vunpack.c.l.b16 %v2346
        %v2563 = vunpack.c.l.b16 %v2347
        %v2564 = vunpack.c.l.b16 %v2348
        %v2565 = vunpack.c.l.b16 %v2349
        %v2566 = vunpack.c.l.b16 %v2350
        %v2567 = vunpack.c.l.b16 %v2351
        %v2568 = vunpack.c.l.b16 %v2352
        %v2569 = vunpack.c.l.b16 %v2353
        %v2570 = vunpack.c.l.b16 %v2354
        %v2571 = vunpack.c.l.b16 %v2355
        %v2572 = vunpack.c.l.b16 %v2356
        %v2573 = vunpack.c.l.b16 %v2357
        %v2574 = vunpack.c.l.b16 %v2358
        %v2575 = vunpack.c.l.b16 %v2359
        %v2576 = vpack.c.b16 %v2469, %v2468
        %v2577 = vpack.c.b16 %v2471, %v2470
        %v2578 = vpack.c.b16 %v2473, %v2472
        %v2579 = vpack.c.b16 %v2475, %v2474
        %v2580 = vpack.c.b16 %v2477, %v2476
        %v2581 = vpack.c.b16 %v2479, %v2478
        %v2582 = vpack.c.b16 %v2481, %v2480
        %v2583 = vpack.c.b16 %v2483, %v2482
        %v2584 = vpack.c.b16 %v2485, %v2484
        %v2585 = vpack.c.b16 %v2487, %v2486
        %v2586 = vpack.c.b16 %v2489, %v2488
        %v2587 = vpack.c.b16 %v2491, %v2490
        %v2588 = vpack.c.b16 %v2493, %v2492
        %v2589 = vpack.c.b16 %v2495, %v2494
        %v2590 = vpack.c.b16 %v2497, %v2496
        %v2591 = vpack.c.b16 %v2499, %v2498
        %v2592 = vpack.c.b16 %v2501, %v2500
        %v2593 = vpack.c.b16 %v2503, %v2502
        %v2594 = vpack.c.b16 %v2505, %v2504
        %v2595 = vpack.c.b16 %v2507, %v2506
        %v2596 = vpack.c.b16 %v2509, %v2508
        %v2597 = vpack.c.b16 %v2511, %v2510
        %v2598 = vpack.c.b16 %v2513, %v2512
        %v2599 = vpack.c.b16 %v2515, %v2514
        %v2600 = vpack.c.b16 %v2517, %v2516
        %v2601 = vpack.c.b16 %v2519, %v2518
        %v2602 = vpack.c.b16 %v2521, %v2520
        %v2603 = vpack.c.b16 %v2523, %v2522
        %v2604 = vpack.c.b16 %v2525, %v2524
        %v2605 = vpack.c.b16 %v2527, %v2526
        %v2606 = vpack.c.b16 %v2529, %v2528
        %v2607 = vpack.c.b16 %v2531, %v2530
        %v2608 = vpack.c.b16 %v2533, %v2532
        %v2609 = vpack.c.b16 %v2535, %v2534
        %v2610 = vpack.c.b16 %v2537, %v2536
        %v2611 = vpack.c.b16 %v2539, %v2538
        %v2612 = vpack.c.b16 %v2541, %v2540
        %v2613 = vpack.c.b16 %v2543, %v2542
        %v2614 = vpack.c.b16 %v2545, %v2544
        %v2615 = vpack.c.b16 %v2547, %v2546
        %v2616 = vpack.c.b16 %v2549, %v2548
        %v2617 = vpack.c.b16 %v2551, %v2550
        %v2618 = vpack.c.b16 %v2553, %v2552
        %v2619 = vpack.c.b16 %v2555, %v2554
        %v2620 = vpack.c.b16 %v2557, %v2556
        %v2621 = vpack.c.b16 %v2559, %v2558
        %v2622 = vpack.c.b16 %v2561, %v2560
        %v2623 = vpack.c.b16 %v2563, %v2562
        %v2624 = vpack.c.b16 %v2565, %v2564
        %v2625 = vpack.c.b16 %v2567, %v2566
        %v2626 = vpack.c.b16 %v2569, %v2568
        %v2627 = vpack.c.b16 %v2571, %v2570
        %v2628 = vpack.c.b16 %v2573, %v2572
        %v2629 = vpack.c.b16 %v2575, %v2574
        %v2685 = vsel %vm1189, %v2251, 0
        %2687 = vmatprep.subr.bf16.mxu0 0
        %2688 = vmatpush1.bf16.msra.mxu0 %v2576
        %2689 = vmatprep.subr.bf16.mxu0 0
        %2690 = vmatpush1.bf16.msra.mxu0 %v2577
        %2691 = vmatprep.subr.bf16.mxu0 0
        %2692 = vmatpush1.bf16.msra.mxu0 %v2578
        %2693 = vmatprep.subr.bf16.mxu0 0
        %2694 = vmatpush1.bf16.msra.mxu0 %v2579
        %2695 = vmatprep.subr.bf16.mxu0 0
        %2696 = vmatpush1.bf16.msra.mxu0 %v2580
        %2697 = vmatprep.subr.bf16.mxu0 0
        %2698 = vmatpush1.bf16.msra.mxu0 %v2581
        %2699 = vmatprep.subr.bf16.mxu0 0
        %2700 = vmatpush1.bf16.msra.mxu0 %v2582
        %2701 = vmatprep.subr.bf16.mxu0 0
        %2702 = vmatpush1.bf16.msra.mxu0 %v2583
        %2703 = vmatprep.subr.bf16.mxu0 0
        %2704 = vmatpush1.bf16.msra.mxu0 %v2584
        %2705 = vmatprep.subr.bf16.mxu0 0
        %2706 = vmatpush1.bf16.msra.mxu0 %v2585
        %2707 = vmatprep.subr.bf16.mxu0 0
        %2708 = vmatpush1.bf16.msra.mxu0 %v2586
        %2709 = vmatprep.subr.bf16.mxu0 0
        %2710 = vmatpush1.bf16.msra.mxu0 %v2587
        %2711 = vmatprep.subr.bf16.mxu0 0
        %2712 = vmatpush1.bf16.msra.mxu0 %v2588
        %2713 = vmatprep.subr.bf16.mxu0 0
        %2714 = vmatpush1.bf16.msra.mxu0 %v2589
        %2715 = vmatprep.subr.bf16.mxu0 0
        %2716 = vmatpush1.bf16.msra.mxu0 %v2590
        %2717 = vmatprep.subr.bf16.mxu0 0
        %2718 = vmatpush1.bf16.msra.mxu0 %v2591
        %2719 = vmatprep.mubr.bf16.mxu0 %v2246
        %2720 = vmatmul.mubr.bf16.gmra.mrb[0].mxu0 %v2245
        %v2721 = vpop.f32.mrb[0].mxu0
        %v2722 = vadd.f32 %v393, %v2721
        %v2723 = vpop.f32.mrb[0].mxu0
        %v2724 = vpop.f32.mrb[0].mxu0
        %v2725 = vadd.f32 %v394, %v2724
        %v2726 = vpop.f32.mrb[0].mxu0
        %2727 = vdwg.mxu0
        %2728 = vmatprep.subr.bf16.mxu0 0
        %2729 = vmatpush1.bf16.msra.mxu0 %v2592
        %2730 = vmatprep.subr.bf16.mxu0 0
        %2731 = vmatpush1.bf16.msra.mxu0 %v2593
        %2732 = vmatprep.subr.bf16.mxu0 0
        %2733 = vmatpush1.bf16.msra.mxu0 %v2594
        %2734 = vmatprep.subr.bf16.mxu0 0
        %2735 = vmatpush1.bf16.msra.mxu0 %v2595
        %2736 = vmatprep.subr.bf16.mxu0 0
        %2737 = vmatpush1.bf16.msra.mxu0 %v2596
        %2738 = vmatprep.subr.bf16.mxu0 0
        %2739 = vmatpush1.bf16.msra.mxu0 %v2597
        %2740 = vmatprep.subr.bf16.mxu0 0
        %2741 = vmatpush1.bf16.msra.mxu0 %v2598
        %2742 = vmatprep.subr.bf16.mxu0 0
        %2743 = vmatpush1.bf16.msra.mxu0 %v2599
        %2744 = vmatprep.subr.bf16.mxu0 0
        %2745 = vmatpush1.bf16.msra.mxu0 %v2600
        %2746 = vmatprep.subr.bf16.mxu0 0
        %2747 = vmatpush1.bf16.msra.mxu0 %v2601
        %2748 = vmatprep.subr.bf16.mxu0 0
        %2749 = vmatpush1.bf16.msra.mxu0 %v2602
        %2750 = vmatprep.subr.bf16.mxu0 0
        %2751 = vmatpush1.bf16.msra.mxu0 %v2603
        %2752 = vmatprep.subr.bf16.mxu0 0
        %2753 = vmatpush1.bf16.msra.mxu0 %v2604
        %2754 = vmatprep.subr.bf16.mxu0 0
        %2755 = vmatpush1.bf16.msra.mxu0 %v2605
        %2756 = vmatprep.subr.bf16.mxu0 0
        %2757 = vmatpush1.bf16.msra.mxu0 %v2606
        %2758 = vmatprep.subr.bf16.mxu0 0
        %2759 = vmatpush1.bf16.msra.mxu0 %v2607
        %2760 = vmatprep.mubr.bf16.mxu0 %v2248
        %2761 = vmatmul.mubr.bf16.gmra.mrb[0].mxu0 %v2247
        %v2762 = vpop.f32.mrb[0].mxu0
        %v2763 = vadd.f32 %v2722, %v2762
        %v2764 = vpop.f32.mrb[0].mxu0
        %v2765 = vpop.f32.mrb[0].mxu0
        %v2766 = vadd.f32 %v2725, %v2765
        %v2767 = vpop.f32.mrb[0].mxu0
        %2768 = vdwg.mxu0
        %2769 = vmatprep.subr.bf16.mxu0 0
        %2770 = vmatpush1.bf16.msra.mxu0 %v2608
        %2771 = vmatprep.subr.bf16.mxu0 0
        %2772 = vmatpush1.bf16.msra.mxu0 %v2609
        %2773 = vmatprep.subr.bf16.mxu0 0
        %2774 = vmatpush1.bf16.msra.mxu0 %v2610
        %2775 = vmatprep.subr.bf16.mxu0 0
        %2776 = vmatpush1.bf16.msra.mxu0 %v2611
        %2777 = vmatprep.subr.bf16.mxu0 0
        %2778 = vmatpush1.bf16.msra.mxu0 %v2612
        %2779 = vmatprep.subr.bf16.mxu0 0
        %2780 = vmatpush1.bf16.msra.mxu0 %v2613
        %2781 = vmatprep.subr.bf16.mxu0 0
        %2782 = vmatpush1.bf16.msra.mxu0 %v2614
        %2783 = vmatprep.subr.bf16.mxu0 0
        %2784 = vmatpush1.bf16.msra.mxu0 %v2615
        %2785 = vmatprep.subr.bf16.mxu0 0
        %2786 = vmatpush1.bf16.msra.mxu0 %v2616
        %2787 = vmatprep.subr.bf16.mxu0 0
        %2788 = vmatpush1.bf16.msra.mxu0 %v2617
        %2789 = vmatprep.subr.bf16.mxu0 0
        %2790 = vmatpush1.bf16.msra.mxu0 %v2618
        %2791 = vmatprep.subr.bf16.mxu0 0
        %2792 = vmatpush1.bf16.msra.mxu0 %v2619
        %2793 = vmatprep.subr.bf16.mxu0 0
        %2794 = vmatpush1.bf16.msra.mxu0 %v2620
        %2795 = vmatprep.subr.bf16.mxu0 0
        %2796 = vmatpush1.bf16.msra.mxu0 %v2621
        %2797 = vmatprep.subr.bf16.mxu0 0
        %2798 = vmatpush1.bf16.msra.mxu0 %v2622
        %2799 = vmatprep.subr.bf16.mxu0 0
        %2800 = vmatpush1.bf16.msra.mxu0 %v2623
        %2801 = vmatprep.mubr.bf16.mxu0 %v2250
        %2802 = vmatmul.mubr.bf16.gmra.mrb[0].mxu0 %v2249
        %v2803 = vpop.f32.mrb[0].mxu0
        %v2804 = vadd.f32 %v2763, %v2803
        %v2805 = vpop.f32.mrb[0].mxu0
        %v2806 = vpop.f32.mrb[0].mxu0
        %v2807 = vadd.f32 %v2766, %v2806
        %v2808 = vpop.f32.mrb[0].mxu0
        %2809 = vdwg.mxu0
        %2810 = vmatprep.subr.bf16.mxu0 0
        %2811 = vmatpush1.bf16.msra.mxu0 %v2624
        %2812 = vmatprep.subr.bf16.mxu0 0
        %2813 = vmatpush1.bf16.msra.mxu0 %v2625
        %2814 = vmatprep.subr.bf16.mxu0 0
        %2815 = vmatpush1.bf16.msra.mxu0 %v2626
        %2816 = vmatprep.subr.bf16.mxu0 0
        %2817 = vmatpush1.bf16.msra.mxu0 %v2627
        %2818 = vmatprep.subr.bf16.mxu0 0
        %2819 = vmatpush1.bf16.msra.mxu0 %v2628
        %2820 = vmatprep.subr.bf16.mxu0 0
        %2821 = vmatpush1.bf16.msra.mxu0 %v2629
        %2822 = vmatprep.subr.bf16.mxu0 0
        %2823 = vmatpush1.bf16.msra.mxu0 0
        %2824 = vmatprep.subr.bf16.mxu0 0
        %2825 = vmatpush1.bf16.msra.mxu0 0
        %2826 = vmatprep.subr.bf16.mxu0 0
        %2827 = vmatpush1.bf16.msra.mxu0 0
        %2828 = vmatprep.subr.bf16.mxu0 0
        %2829 = vmatpush1.bf16.msra.mxu0 0
        %2830 = vmatprep.subr.bf16.mxu0 0
        %2831 = vmatpush1.bf16.msra.mxu0 0
        %2832 = vmatprep.subr.bf16.mxu0 0
        %2833 = vmatpush1.bf16.msra.mxu0 0
        %2834 = vmatprep.subr.bf16.mxu0 0
        %2835 = vmatpush1.bf16.msra.mxu0 0
        %2836 = vmatprep.subr.bf16.mxu0 0
        %2837 = vmatpush1.bf16.msra.mxu0 0
        %2838 = vmatprep.subr.bf16.mxu0 0
        %2839 = vmatpush1.bf16.msra.mxu0 0
        %2840 = vmatprep.subr.bf16.mxu0 0
        %2841 = vmatpush1.bf16.msra.mxu0 0
        %2842 = vmatprep.mubr.bf16.mxu0 0
        %2843 = vmatmul.mubr.bf16.gmra.mrb[0].mxu0 %v2685
        %v2844 = vpop.f32.mrb[0].mxu0
        %v2845 = vadd.f32 %v2804, %v2844
        %v2846 = vpop.f32.mrb[0].mxu0
        %v2847 = vpop.f32.mrb[0].mxu0
        %v2848 = vadd.f32 %v2807, %v2847
        %v2849 = vpop.f32.mrb[0].mxu0
        %2850 = vdwg.mxu0
        %v2851 = vtanh.pop %v2845
        %v2852 = vtanh.pop %v2848
        %v2853 = vmul.f32 %v1974, %v381
        %v2854 = vmul.f32 %v1976, %v382
        %v2855 = vsub.f32 1.0, %v1974
        %v2856 = vsub.f32 1.0, %v1976
        %v2857 = vmul.f32 %v2855, %v2851
        %v2858 = vmul.f32 %v2856, %v2852
        %v2859 = vadd.f32 %v2853, %v2857
        %v2860 = vadd.f32 %v2854, %v2858
        %v2862 = vrot.slane %v2859, 1
        %2863 = vrot.lane.b32.xlu0 %v2862, 32
        %v2864 = vpop.permute.xlu0 %2863
        %v2866 = vrot.slane %v2859, 2
        %2867 = vrot.lane.b32.xlu0 %v2866, 64
        %v2868 = vpop.permute.xlu0 %2867
        %v2870 = vrot.slane %v2859, 3
        %2871 = vrot.lane.b32.xlu0 %v2870, 96
        %v2872 = vpop.permute.xlu0 %2871
        %v2874 = vrot.slane %v2859, 4
        %v2876 = vrot.slane %v2859, 5
        %2877 = vrot.lane.b32.xlu0 %v2876, 32
        %v2878 = vpop.permute.xlu0 %2877
        %v2880 = vrot.slane %v2859, 6
        %2881 = vrot.lane.b32.xlu0 %v2880, 64
        %v2882 = vpop.permute.xlu0 %2881
        %v2884 = vrot.slane %v2859, 7
        %2885 = vrot.lane.b32.xlu0 %v2884, 96
        %v2886 = vpop.permute.xlu0 %2885
        %v2889 = vrot.slane %v2860, 1
        %2890 = vrot.lane.b32.xlu0 %v2889, 32
        %v2891 = vpop.permute.xlu0 %2890
        %v2893 = vrot.slane %v2860, 2
        %2894 = vrot.lane.b32.xlu0 %v2893, 64
        %v2895 = vpop.permute.xlu0 %2894
        %v2897 = vrot.slane %v2860, 3
        %2898 = vrot.lane.b32.xlu0 %v2897, 96
        %v2899 = vpop.permute.xlu0 %2898
        %v2901 = vrot.slane %v2860, 4
        %v2903 = vrot.slane %v2860, 5
        %2904 = vrot.lane.b32.xlu0 %v2903, 32
        %v2905 = vpop.permute.xlu0 %2904
        %v2907 = vrot.slane %v2860, 6
        %2908 = vrot.lane.b32.xlu0 %v2907, 64
        %v2909 = vpop.permute.xlu0 %2908
        %v2911 = vrot.slane %v2860, 7
        %2912 = vrot.lane.b32.xlu0 %v2911, 96
        %v2913 = vpop.permute.xlu0 %2912
        %vm2915 = vcmask 261120
        %v2916 = vsel %vm2915, %v2859, %v2864
        %vm2917 = vcmask 523264
        %v2918 = vsel %vm2917, %v2916, %v2868
        %v2919 = vsel %vm1189, %v2918, %v2872
        %v2920 = vsel %vm2915, %v2874, %v2878
        %v2921 = vsel %vm2917, %v2920, %v2882
        %v2922 = vsel %vm1189, %v2921, %v2886
        %v2923 = vsel %vm2915, %v2860, %v2891
        %v2924 = vsel %vm2917, %v2923, %v2895
        %v2925 = vsel %vm1189, %v2924, %v2899
        %v2926 = vsel %vm2915, %v2901, %v2905
        %v2927 = vsel %vm2917, %v2926, %v2909
        %v2928 = vsel %vm1189, %v2927, %v2913
        %v2933 = vcombine.low %v2919, %v2922
        %v2934 = vcombine.low %v2925, %v2928
        %v2936 = vunpack.c.l.s4 1966171168
        %v2937 = vunpack.c.0.s8 %v2936
        %v2938 = vlaneseq
        %v2939 = vshrl.u32 %v2938, 7
        %v2940 = vsub.s32 %v2937, %v2939
        %v2941 = vrot.slane %v2933, %v2940
        %v2943 = vunpack.c.l.s4 1966171168
        %v2944 = vunpack.c.0.s8 %v2943
        %v2945 = vlaneseq
        %v2946 = vshrl.u32 %v2945, 7
        %v2947 = vsub.s32 %v2944, %v2946
        %v2948 = vrot.slane %v2934, %v2947
        %v2949 = vcombine.low %v2941, %v2948
        %v2951 = vunpack.c.l.s4 1966171168
        %v2952 = vunpack.c.0.s8 %v2951
        %v2953 = vlaneseq
        %v2954 = vshrl.u32 %v2953, 7
        %v2955 = vsub.s32 %v2952, %v2954
        %v2956 = vrot.slane %v2949, %v2955
        %v2958 = vlaneseq
        %vm2959 = vcmp.ge.s32.totalorder %v2958, 0
        %vm2960 = vcmp.lt.s32.totalorder %v2958, 512
        %vm2961 = vmand %vm2959, %vm2960
        %2962 = vst.msk [vmem:[%s367] sm:$0xf] %vm2961, %v2956
        %s2963 = sand.u32 %s252, 1
        %s2964 = scalar_lea.sflag [#allocation3], %s2963
        %s2965 = sand.u32 %s252, 1
        %s2966 = smul.addr %s2965, 4
        %s2967 = scalar_lea.vmem [#allocation2], %s2966
        // Predicated region
        $region61: #{tpu_custom_call.1} parent=59 // pred_check
          %p2968 = pneg %p262
        $region62: #{tpu_custom_call.1} parent=59 // pred_check_branch
          %2970 = sbr.rel (%p2968) target = $region64
        $region63: #{tpu_custom_call.1} parent=59 // pred_region
          %s2972 = ssub.s32 64, 64
          %2973 = vsyncadd %s2964, %s2972
          %s2974 = smul.addr %s24, 4
          %s2975 = smul.addr %s2974, 16
          %s2976 = scalar_lea.hbm %s10, %s2975
          %s2978 = sshll.u32 %s2967, 4
          %s2979 = int_to_ptr.vmem [resolvable:$true] %s2978
          %2981 = dma.vmem_to_hbm [thread:$0]  %s2979, 64, %s2976, %s2964
        $region64: #{tpu_custom_call.1} parent=59 // pred_fallthru
          _
      $region60: #{tpu_custom_call.1} parent=5 // pred_fallthru
        _
      %p2982 = scmp.le.s32.totalorder 2, %s19
      // Predicated region
      $region65: #{tpu_custom_call.1} parent=5 // pred_check
        %p2983 = pneg %p2982
      $region66: #{tpu_custom_call.1} parent=5 // pred_check_branch
        %2985 = sbr.rel (%p2983) target = $region68
      $region67: #{tpu_custom_call.1} parent=5 // pred_region
        %s2986 = ssub.s32 %s19, 2
        // Predicated region
        $region69: #{tpu_custom_call.1} parent=67 // pred_check
          %p2987 = pneg %p268
        $region70: #{tpu_custom_call.1} parent=67 // pred_check_branch
          %2989 = sbr.rel (%p2987) target = $region72
        $region71: #{tpu_custom_call.1} parent=67 // pred_region
          %s2990 = sand.u32 %s253, 1
          %s2991 = scalar_lea.sflag [#allocation3], %s2990
          %s2992 = sand.u32 %s253, 1
          %s2993 = smul.addr %s2992, 4
          %s2994 = scalar_lea.vmem [#allocation2], %s2993
          %2995 = dma.done %s2991, 64
        $region72: #{tpu_custom_call.1} parent=67 // pred_fallthru
          _
      $region68: #{tpu_custom_call.1} parent=5 // pred_fallthru
        _
    $region6: #{tpu_custom_call.1} parent=1 // loop_footer
      %s23 = sadd.s32 1, %s19
    $region7: #{tpu_custom_call.1} parent=1 // loop_footer_branch
      %18 = sbr.rel target = $region3
    $region8: #{tpu_custom_call.1} parent=1 // loop_exit
      _
    %2996 = vsyncpa [#allocation3], 1
    %s2997 = scalar_lea.sflag [#allocation3], 1
    %2998 = vsyncpa %s2997, 1

</llo_original>
